<compile_context>
chip_gen: v7x
topology: tpu7x:2x2x1
jax: 0.10.0
libtpu: 0.0.40
codegen_flags: <defaults>
</compile_context>

<pallas_src>
import jax
import jax.numpy as jnp
from jax import lax
from jax.experimental import pallas as pl
from jax.experimental.pallas import tpu as pltpu


# ----------------------------- Pallas kernel --------------------------------

def _make_kernel(B, F, A, W, K, Wd, w_rows, out_lanes):
    (w1_row, w2_row, w3_row, wh_row, sel_row, head_blk) = w_rows
    BF = B * F
    BH = w_rows_bh = None  # placeholder (set right below for clarity)
    BH = (w2_row // K)     # = B * H  (layer-2/3 tap block height)
    L = A * W
    lo1 = L - (K - 1)
    lo2 = lo1 - (K - 1)
    lo3 = lo2 - (K - 1)

    def kernel(x_ref, w_ref, b_ref, out_ref):
        # x_ref  : (B*F, A*W) f32   rows = (batch, feature), lanes = (asset, window)
        # w_ref  : (R, WIDTH) bf16  packed row-blocks: conv taps | head taps | selection
        # b_ref  : (B*H, 4)  f32    bias columns [b1 | b2 | b3 | head]
        # out_ref: (2B, 128) f32    rows [0,B)=softmax(mu), [B,2B)=logvar; lanes >= A unused
        h = x_ref[...].astype(jnp.bfloat16)                      # (B*F, L)

        def conv_relu(h_bf, row0, cin, lo_out, bias_col):
            # per-tap accumulated matmuls (no im2col staging slab), f32 accumulate.
            acc = None
            for k in range(K):
                wk = w_ref[row0 + k * BH: row0 + (k + 1) * BH, 0:cin]      # (B*H, cin) bf16
                p = jnp.dot(wk, h_bf[:, k:k + lo_out],
                            preferred_element_type=jnp.float32)
                acc = p if acc is None else acc + p
            return jnp.maximum(acc + bias_col, 0.0).astype(jnp.bfloat16)   # bias/ReLU in f32

        h = conv_relu(h, w1_row, BF, lo1, b_ref[:, 0:1])         # (B*H, lo1)
        h = conv_relu(h, w2_row, BH, lo2, b_ref[:, 1:2])         # (B*H, lo2)
        h = conv_relu(h, w3_row, BH, lo3, b_ref[:, 2:3])         # (B*H, lo3)

        # Gather the valid head-window columns (asset a, tap w lives at lane a*W + w) into
        # a compact (B*H, Wd*A) slab with ONE constant 0/1 matmul (exact selection of the
        # bf16 values; no in-kernel iota masks, no wide heads intermediate).
        sel = w_ref[sel_row: sel_row + lo3, 0:Wd * A]                       # (lo3, Wd*A) bf16
        compact = jnp.dot(h, sel, preferred_element_type=jnp.float32)
        compact = compact.astype(jnp.bfloat16)                              # exact re-cast

        # mu/logvar heads: Wd accumulated (2B, B*H) @ (B*H, A) matmuls on contiguous slices.
        acc = None
        for w in range(Wd):
            whw = w_ref[wh_row + w * head_blk: wh_row + w * head_blk + 2 * B, 0:BH]
            p = jnp.dot(whw, compact[:, w * A:(w + 1) * A],
                        preferred_element_type=jnp.float32)
            acc = p if acc is None else acc + p
        picked = acc + b_ref[0:2 * B, 3:4]        # (2B, A): rows = [mu b0..b(B-1), lv b0..]

        # softmax over assets for the mu rows (f32; exact reciprocal -- see review note).
        mu_u = picked[0:B, :]
        m = jnp.max(mu_u, axis=1, keepdims=True)
        e = jnp.exp(mu_u - m)
        s = jnp.sum(e, axis=1, keepdims=True)
        mu_sm = e * pl.reciprocal(s, approx=False)

        res = jnp.concatenate([mu_sm, picked[B:2 * B, :]], axis=0)          # (2B, A) f32
        pad = jnp.zeros((2 * B, out_lanes - A), jnp.float32)
        out_ref[...] = jnp.concatenate([res, pad], axis=1)                  # ONE lane-dense store

    return kernel


# ------------------------------ wrapper --------------------------------------

def cnn_whole_forward(x_nchw, params):
    """x_nchw: (B, F, A, W) float32 (PyTorch NCHW). Returns (softmax(mu) (B,A), logvar (B,A))."""
    w1, b1, w2, b2, w3, b3, wm, bm, wv, bv = params
    B, F, A, W = x_nchw.shape
    H, K = w1.shape[0], w1.shape[3]
    Wd = wm.shape[3]
    # The no-repack/garbage-tail scheme relies on the head width matching get_dim(W, 3, K).
    assert Wd == W - 3 * (K - 1), "head conv width must equal W - 3*(K-1)"
    BF, BH = B * F, B * H
    L = A * W
    lo3 = L - 3 * (K - 1)
    OUT_LANES = 128
    assert A <= OUT_LANES
    WIDTH = max(BF, BH, Wd * A)            # lane width of the packed weight slab (64 here)

    # ---- pack all conv taps, head taps and the selection matrix into ONE bf16 slab ----
    # (In production this packing is a one-time constant; here it is a handful of tiny
    #  XLA ops per call.)
    def bd(w2d):                           # (O, I) -> block-diagonal (B*O, B*I) over batch
        return jnp.kron(jnp.eye(B, dtype=w2d.dtype), w2d)

    def padded(arr, rows, width=WIDTH):
        r, c = arr.shape
        return jnp.pad(arr.astype(jnp.float32), ((0, rows - r), (0, width - c)))

    head_blk = 16                          # >= 2B, multiple of 16 (bf16 sublane tile)
    blocks = []
    for wconv in (w1, w2, w3):
        for k in range(K):
            blocks.append(padded(bd(wconv[:, :, 0, k]), BH))               # (B*H, B*Cin)
    for w in range(Wd):                    # head taps, rows ordered r*B + b (mu rows first)
        tap = jnp.concatenate(
            [jnp.kron(jnp.eye(B, dtype=whd.dtype), whd[0, :, 0, w][None, :])
             for whd in (wm, wv)], axis=0)                                  # (2B, B*H)
        blocks.append(padded(tap, head_blk))
    # selection matrix: Sel[a*W + w, w*A + a] = 1 (gathers valid head windows, w-major).
    a_idx = jnp.arange(A)[:, None]
    w_idx = jnp.arange(Wd)[None, :]
    sel = jnp.zeros((lo3, Wd * A), jnp.float32)
    sel = sel.at[(a_idx * W + w_idx).reshape(-1),
                 (w_idx * A + a_idx).reshape(-1)].set(1.0)
    blocks.append(padded(sel, lo3))

    w1_row = 0
    w2_row = K * BH
    w3_row = 2 * K * BH
    wh_row = 3 * K * BH
    sel_row = wh_row + Wd * head_blk
    wslab = jnp.concatenate(blocks, axis=0).astype(jnp.bfloat16)            # (sel_row+lo3, WIDTH)

    # ---- bias columns (kept f32; added after the f32 MXU accumulation) ----------------
    bias = jnp.zeros((BH, 4), jnp.float32)
    bias = bias.at[:, 0].set(jnp.tile(b1, B))
    bias = bias.at[:, 1].set(jnp.tile(b2, B))
    bias = bias.at[:, 2].set(jnp.tile(b3, B))
    bias = bias.at[:2 * B, 3].set(jnp.concatenate([jnp.tile(bm, B), jnp.tile(bv, B)]))

    # ---- input slab: free (bitcast) reshape, no transpose / pad pass ------------------
    x2 = x_nchw.reshape(BF, L)

    kernel = _make_kernel(B, F, A, W, K, Wd,
                          (w1_row, w2_row, w3_row, wh_row, sel_row, head_blk), OUT_LANES)

    out = pl.pallas_call(
        kernel,
        out_shape=jax.ShapeDtypeStruct((2 * B, OUT_LANES), jnp.float32),
        grid=(1,),                                        # whole batch in one grid step
        in_specs=[pl.BlockSpec(x2.shape, lambda i: (0, 0)),
                  pl.BlockSpec(wslab.shape, lambda i: (0, 0)),
                  pl.BlockSpec(bias.shape, lambda i: (0, 0))],
        out_specs=pl.BlockSpec((2 * B, OUT_LANES), lambda i: (0, 0)),
        compiler_params=pltpu.CompilerParams(dimension_semantics=("arbitrary",)),
    )(x2, wslab, bias)

    return out[:B, :A], out[B:2 * B, :A]


# --------------------------- pure-JAX references ------------------------------

def reference_forward(x_nchw, params, matmul_dtype=jnp.float32):
    """XLA reference. matmul_dtype=bfloat16 mirrors the kernel's bf16-input / f32-acc dots."""
    w1, b1, w2, b2, w3, b3, wm, bm, wv, bv = params

    def conv(h, w, b):
        y = lax.conv_general_dilated(
            h.astype(matmul_dtype), w.astype(matmul_dtype),
            window_strides=(1, 1), padding='VALID',
            dimension_numbers=('NCHW', 'OIHW', 'NCHW'),
            preferred_element_type=jnp.float32,
            precision=lax.Precision.HIGHEST)
        return y + b[None, :, None, None]

    h = jax.nn.relu(conv(x_nchw, w1, b1))
    h = jax.nn.relu(conv(h, w2, b2))
    h = jax.nn.relu(conv(h, w3, b3))
    mu_u = conv(h, wm, bm)[:, 0, :, 0]                    # (B, A)  (torch .squeeze())
    lv = conv(h, wv, bv)[:, 0, :, 0]                      # (B, A)
    return jax.nn.softmax(mu_u, axis=1), lv


# --------------------------------- main ---------------------------------------

if __name__ == "__main__":
    # Shapes consistent with the module:
    #   n_batch=2, n_feature=4, n_asset=8, n_window=20, n_hidden=16, filter=5
    B, F, A, W, H, K = 2, 4, 8, 20, 16, 5
    Wd = W - 3 * (K - 1)                                  # get_dim(20, layer=3, filter=5) = 8

    key = jax.random.PRNGKey(0)
    ks = jax.random.split(key, 11)

    def init(k, shape, scale):
        return (scale * jax.random.normal(k, shape)).astype(jnp.float32)

    params = (
        init(ks[0], (H, F, 1, K), 0.2),    # filter1.weight (torch OIHW)
        init(ks[1], (H,), 0.1),            # filter1.bias
        init(ks[2], (H, H, 1, K), 0.1),    # filter2.weight
        init(ks[3], (H,), 0.1),            # filter2.bias
        init(ks[4], (H, H, 1, K), 0.1),    # filter3.weight
        init(ks[5], (H,), 0.1),            # filter3.bias
        init(ks[6], (1, H, 1, Wd), 0.1),   # mu.weight
        init(ks[7], (1,), 0.1),            # mu.bias
        init(ks[8], (1, H, 1, Wd), 0.1),   # logvar.weight
        init(ks[9], (1,), 0.1),            # logvar.bias
    )
    x = init(ks[10], (B, F, A, W), 1.0)                   # NCHW input like PyTorch

    mu, logvar = cnn_whole_forward(x, params)
    mu = jax.block_until_ready(mu)
    logvar = jax.block_until_ready(logvar)
    assert mu.shape == (B, A) and logvar.shape == (B, A)

    # Tight check against the precision-matched (bf16-input, f32-accumulate) reference.
    mu_bf, lv_bf = reference_forward(x, params, matmul_dtype=jnp.bfloat16)
    assert jnp.allclose(mu, mu_bf, rtol=2e-3, atol=2e-3), "mu mismatch (bf16-matched ref)"
    assert jnp.allclose(logvar, lv_bf, rtol=2e-3, atol=2e-3), "logvar mismatch (bf16-matched ref)"

    # Loose sanity check against the pure-f32 reference (bound on bf16 input rounding).
    mu_f32, lv_f32 = reference_forward(x, params, matmul_dtype=jnp.float32)
    assert jnp.allclose(mu, mu_f32, rtol=5e-2, atol=5e-2), "mu mismatch (f32 ref)"
    assert jnp.allclose(logvar, lv_f32, rtol=5e-2, atol=5e-2), "logvar mismatch (f32 ref)"

    assert jnp.allclose(jnp.sum(mu, axis=1), 1.0, atol=1e-5), "softmax not normalized"

    print("KERNEL_OK")
</pallas_src>

<mosaic_0001>
module attributes {stable_mosaic.version = 11 : i64} {
  func.func @kernel(%arg0: i32, %arg1: memref<8x160xf32, #tpu.memory_space<vmem>>, %arg2: memref<756x64xbf16, #tpu.memory_space<vmem>>, %arg3: memref<32x4xf32, #tpu.memory_space<vmem>>, %arg4: memref<4x128xf32, #tpu.memory_space<vmem>>) attributes {dimension_semantics = [#tpu.dimension_semantics<arbitrary>], iteration_bounds = array<i64: 1>, scalar_prefetch = 0 : i64, scratch_operands = 0 : i64, tpu.core_type = #tpu.core_type<tc>, window_params = [{pipeline_mode = #tpu.pipeline_mode<synchronous>, transform_indices = @transform_0, window_bounds = array<i64: 8, 160>}, {pipeline_mode = #tpu.pipeline_mode<synchronous>, transform_indices = @transform_1, window_bounds = array<i64: 756, 64>}, {pipeline_mode = #tpu.pipeline_mode<synchronous>, transform_indices = @transform_2, window_bounds = array<i64: 32, 4>}, {pipeline_mode = #tpu.pipeline_mode<synchronous>, transform_indices = @transform_3, window_bounds = array<i64: 4, 128>}]} {
    %c0 = arith.constant 0 : index
    %c0_0 = arith.constant 0 : index
    %0 = vector.load %arg1[%c0, %c0_0] : memref<8x160xf32, #tpu.memory_space<vmem>>, vector<8x160xf32>
    %1 = arith.truncf %0 : vector<8x160xf32> to vector<8x160xbf16>
    %c0_1 = arith.constant 0 : index
    %c0_2 = arith.constant 0 : index
    %2 = vector.load %arg3[%c0_1, %c0_2] : memref<32x4xf32, #tpu.memory_space<vmem>>, vector<32x1xf32>
    %c0_3 = arith.constant 0 : index
    %c0_4 = arith.constant 0 : index
    %3 = vector.load %arg2[%c0_3, %c0_4] : memref<756x64xbf16, #tpu.memory_space<vmem>>, vector<32x8xbf16>
    %4 = vector.extract_strided_slice %1 {offsets = [0, 0], sizes = [8, 156], strides = [1, 1]} : vector<8x160xbf16> to vector<8x156xbf16>
    %cst = arith.constant dense<0.000000e+00> : vector<32x156xf32>
    %5 = tpu.matmul %3, %4, %cst {dimension_numbers = #tpu.dot_dimension_numbers<[1], [0], [0], [1], [0, 0, 1, 1], [], []>} : vector<32x8xbf16>, vector<8x156xbf16>, vector<32x156xf32> -> vector<32x156xf32>
    %c32 = arith.constant 32 : index
    %c0_5 = arith.constant 0 : index
    %6 = vector.load %arg2[%c32, %c0_5] : memref<756x64xbf16, #tpu.memory_space<vmem>>, vector<32x8xbf16>
    %7 = vector.extract_strided_slice %1 {offsets = [0, 1], sizes = [8, 156], strides = [1, 1]} : vector<8x160xbf16> to vector<8x156xbf16>
    %cst_6 = arith.constant dense<0.000000e+00> : vector<32x156xf32>
    %8 = tpu.matmul %6, %7, %cst_6 {dimension_numbers = #tpu.dot_dimension_numbers<[1], [0], [0], [1], [0, 0, 1, 1], [], []>} : vector<32x8xbf16>, vector<8x156xbf16>, vector<32x156xf32> -> vector<32x156xf32>
    %9 = arith.addf %5, %8 : vector<32x156xf32>
    %c64 = arith.constant 64 : index
    %c0_7 = arith.constant 0 : index
    %10 = vector.load %arg2[%c64, %c0_7] : memref<756x64xbf16, #tpu.memory_space<vmem>>, vector<32x8xbf16>
    %11 = vector.extract_strided_slice %1 {offsets = [0, 2], sizes = [8, 156], strides = [1, 1]} : vector<8x160xbf16> to vector<8x156xbf16>
    %cst_8 = arith.constant dense<0.000000e+00> : vector<32x156xf32>
    %12 = tpu.matmul %10, %11, %cst_8 {dimension_numbers = #tpu.dot_dimension_numbers<[1], [0], [0], [1], [0, 0, 1, 1], [], []>} : vector<32x8xbf16>, vector<8x156xbf16>, vector<32x156xf32> -> vector<32x156xf32>
    %13 = arith.addf %9, %12 : vector<32x156xf32>
    %c96 = arith.constant 96 : index
    %c0_9 = arith.constant 0 : index
    %14 = vector.load %arg2[%c96, %c0_9] : memref<756x64xbf16, #tpu.memory_space<vmem>>, vector<32x8xbf16>
    %15 = vector.extract_strided_slice %1 {offsets = [0, 3], sizes = [8, 156], strides = [1, 1]} : vector<8x160xbf16> to vector<8x156xbf16>
    %cst_10 = arith.constant dense<0.000000e+00> : vector<32x156xf32>
    %16 = tpu.matmul %14, %15, %cst_10 {dimension_numbers = #tpu.dot_dimension_numbers<[1], [0], [0], [1], [0, 0, 1, 1], [], []>} : vector<32x8xbf16>, vector<8x156xbf16>, vector<32x156xf32> -> vector<32x156xf32>
    %17 = arith.addf %13, %16 : vector<32x156xf32>
    %c128 = arith.constant 128 : index
    %c0_11 = arith.constant 0 : index
    %18 = vector.load %arg2[%c128, %c0_11] : memref<756x64xbf16, #tpu.memory_space<vmem>>, vector<32x8xbf16>
    %19 = vector.extract_strided_slice %1 {offsets = [0, 4], sizes = [8, 156], strides = [1, 1]} : vector<8x160xbf16> to vector<8x156xbf16>
    %cst_12 = arith.constant dense<0.000000e+00> : vector<32x156xf32>
    %20 = tpu.matmul %18, %19, %cst_12 {dimension_numbers = #tpu.dot_dimension_numbers<[1], [0], [0], [1], [0, 0, 1, 1], [], []>} : vector<32x8xbf16>, vector<8x156xbf16>, vector<32x156xf32> -> vector<32x156xf32>
    %21 = arith.addf %17, %20 : vector<32x156xf32>
    %22 = vector.broadcast %2 : vector<32x1xf32> to vector<32x156xf32>
    %23 = arith.addf %21, %22 : vector<32x156xf32>
    %cst_13 = arith.constant 0.000000e+00 : f32
    %24 = vector.broadcast %cst_13 : f32 to vector<32x156xf32>
    %25 = arith.maximumf %23, %24 : vector<32x156xf32>
    %26 = arith.truncf %25 : vector<32x156xf32> to vector<32x156xbf16>
    %c0_14 = arith.constant 0 : index
    %c1 = arith.constant 1 : index
    %27 = vector.load %arg3[%c0_14, %c1] : memref<32x4xf32, #tpu.memory_space<vmem>>, vector<32x1xf32>
    %c160 = arith.constant 160 : index
    %c0_15 = arith.constant 0 : index
    %28 = vector.load %arg2[%c160, %c0_15] : memref<756x64xbf16, #tpu.memory_space<vmem>>, vector<32x32xbf16>
    %29 = vector.extract_strided_slice %26 {offsets = [0, 0], sizes = [32, 152], strides = [1, 1]} : vector<32x156xbf16> to vector<32x152xbf16>
    %cst_16 = arith.constant dense<0.000000e+00> : vector<32x152xf32>
    %30 = tpu.matmul %28, %29, %cst_16 {dimension_numbers = #tpu.dot_dimension_numbers<[1], [0], [0], [1], [0, 0, 1, 1], [], []>} : vector<32x32xbf16>, vector<32x152xbf16>, vector<32x152xf32> -> vector<32x152xf32>
    %c192 = arith.constant 192 : index
    %c0_17 = arith.constant 0 : index
    %31 = vector.load %arg2[%c192, %c0_17] : memref<756x64xbf16, #tpu.memory_space<vmem>>, vector<32x32xbf16>
    %32 = vector.extract_strided_slice %26 {offsets = [0, 1], sizes = [32, 152], strides = [1, 1]} : vector<32x156xbf16> to vector<32x152xbf16>
    %cst_18 = arith.constant dense<0.000000e+00> : vector<32x152xf32>
    %33 = tpu.matmul %31, %32, %cst_18 {dimension_numbers = #tpu.dot_dimension_numbers<[1], [0], [0], [1], [0, 0, 1, 1], [], []>} : vector<32x32xbf16>, vector<32x152xbf16>, vector<32x152xf32> -> vector<32x152xf32>
    %34 = arith.addf %30, %33 : vector<32x152xf32>
    %c224 = arith.constant 224 : index
    %c0_19 = arith.constant 0 : index
    %35 = vector.load %arg2[%c224, %c0_19] : memref<756x64xbf16, #tpu.memory_space<vmem>>, vector<32x32xbf16>
    %36 = vector.extract_strided_slice %26 {offsets = [0, 2], sizes = [32, 152], strides = [1, 1]} : vector<32x156xbf16> to vector<32x152xbf16>
    %cst_20 = arith.constant dense<0.000000e+00> : vector<32x152xf32>
    %37 = tpu.matmul %35, %36, %cst_20 {dimension_numbers = #tpu.dot_dimension_numbers<[1], [0], [0], [1], [0, 0, 1, 1], [], []>} : vector<32x32xbf16>, vector<32x152xbf16>, vector<32x152xf32> -> vector<32x152xf32>
    %38 = arith.addf %34, %37 : vector<32x152xf32>
    %c256 = arith.constant 256 : index
    %c0_21 = arith.constant 0 : index
    %39 = vector.load %arg2[%c256, %c0_21] : memref<756x64xbf16, #tpu.memory_space<vmem>>, vector<32x32xbf16>
    %40 = vector.extract_strided_slice %26 {offsets = [0, 3], sizes = [32, 152], strides = [1, 1]} : vector<32x156xbf16> to vector<32x152xbf16>
    %cst_22 = arith.constant dense<0.000000e+00> : vector<32x152xf32>
    %41 = tpu.matmul %39, %40, %cst_22 {dimension_numbers = #tpu.dot_dimension_numbers<[1], [0], [0], [1], [0, 0, 1, 1], [], []>} : vector<32x32xbf16>, vector<32x152xbf16>, vector<32x152xf32> -> vector<32x152xf32>
    %42 = arith.addf %38, %41 : vector<32x152xf32>
    %c288 = arith.constant 288 : index
    %c0_23 = arith.constant 0 : index
    %43 = vector.load %arg2[%c288, %c0_23] : memref<756x64xbf16, #tpu.memory_space<vmem>>, vector<32x32xbf16>
    %44 = vector.extract_strided_slice %26 {offsets = [0, 4], sizes = [32, 152], strides = [1, 1]} : vector<32x156xbf16> to vector<32x152xbf16>
    %cst_24 = arith.constant dense<0.000000e+00> : vector<32x152xf32>
    %45 = tpu.matmul %43, %44, %cst_24 {dimension_numbers = #tpu.dot_dimension_numbers<[1], [0], [0], [1], [0, 0, 1, 1], [], []>} : vector<32x32xbf16>, vector<32x152xbf16>, vector<32x152xf32> -> vector<32x152xf32>
    %46 = arith.addf %42, %45 : vector<32x152xf32>
    %47 = vector.broadcast %27 : vector<32x1xf32> to vector<32x152xf32>
    %48 = arith.addf %46, %47 : vector<32x152xf32>
    %cst_25 = arith.constant 0.000000e+00 : f32
    %49 = vector.broadcast %cst_25 : f32 to vector<32x152xf32>
    %50 = arith.maximumf %48, %49 : vector<32x152xf32>
    %51 = arith.truncf %50 : vector<32x152xf32> to vector<32x152xbf16>
    %c0_26 = arith.constant 0 : index
    %c2 = arith.constant 2 : index
    %52 = vector.load %arg3[%c0_26, %c2] : memref<32x4xf32, #tpu.memory_space<vmem>>, vector<32x1xf32>
    %c320 = arith.constant 320 : index
    %c0_27 = arith.constant 0 : index
    %53 = vector.load %arg2[%c320, %c0_27] : memref<756x64xbf16, #tpu.memory_space<vmem>>, vector<32x32xbf16>
    %54 = vector.extract_strided_slice %51 {offsets = [0, 0], sizes = [32, 148], strides = [1, 1]} : vector<32x152xbf16> to vector<32x148xbf16>
    %cst_28 = arith.constant dense<0.000000e+00> : vector<32x148xf32>
    %55 = tpu.matmul %53, %54, %cst_28 {dimension_numbers = #tpu.dot_dimension_numbers<[1], [0], [0], [1], [0, 0, 1, 1], [], []>} : vector<32x32xbf16>, vector<32x148xbf16>, vector<32x148xf32> -> vector<32x148xf32>
    %c352 = arith.constant 352 : index
    %c0_29 = arith.constant 0 : index
    %56 = vector.load %arg2[%c352, %c0_29] : memref<756x64xbf16, #tpu.memory_space<vmem>>, vector<32x32xbf16>
    %57 = vector.extract_strided_slice %51 {offsets = [0, 1], sizes = [32, 148], strides = [1, 1]} : vector<32x152xbf16> to vector<32x148xbf16>
    %cst_30 = arith.constant dense<0.000000e+00> : vector<32x148xf32>
    %58 = tpu.matmul %56, %57, %cst_30 {dimension_numbers = #tpu.dot_dimension_numbers<[1], [0], [0], [1], [0, 0, 1, 1], [], []>} : vector<32x32xbf16>, vector<32x148xbf16>, vector<32x148xf32> -> vector<32x148xf32>
    %59 = arith.addf %55, %58 : vector<32x148xf32>
    %c384 = arith.constant 384 : index
    %c0_31 = arith.constant 0 : index
    %60 = vector.load %arg2[%c384, %c0_31] : memref<756x64xbf16, #tpu.memory_space<vmem>>, vector<32x32xbf16>
    %61 = vector.extract_strided_slice %51 {offsets = [0, 2], sizes = [32, 148], strides = [1, 1]} : vector<32x152xbf16> to vector<32x148xbf16>
    %cst_32 = arith.constant dense<0.000000e+00> : vector<32x148xf32>
    %62 = tpu.matmul %60, %61, %cst_32 {dimension_numbers = #tpu.dot_dimension_numbers<[1], [0], [0], [1], [0, 0, 1, 1], [], []>} : vector<32x32xbf16>, vector<32x148xbf16>, vector<32x148xf32> -> vector<32x148xf32>
    %63 = arith.addf %59, %62 : vector<32x148xf32>
    %c416 = arith.constant 416 : index
    %c0_33 = arith.constant 0 : index
    %64 = vector.load %arg2[%c416, %c0_33] : memref<756x64xbf16, #tpu.memory_space<vmem>>, vector<32x32xbf16>
    %65 = vector.extract_strided_slice %51 {offsets = [0, 3], sizes = [32, 148], strides = [1, 1]} : vector<32x152xbf16> to vector<32x148xbf16>
    %cst_34 = arith.constant dense<0.000000e+00> : vector<32x148xf32>
    %66 = tpu.matmul %64, %65, %cst_34 {dimension_numbers = #tpu.dot_dimension_numbers<[1], [0], [0], [1], [0, 0, 1, 1], [], []>} : vector<32x32xbf16>, vector<32x148xbf16>, vector<32x148xf32> -> vector<32x148xf32>
    %67 = arith.addf %63, %66 : vector<32x148xf32>
    %c448 = arith.constant 448 : index
    %c0_35 = arith.constant 0 : index
    %68 = vector.load %arg2[%c448, %c0_35] : memref<756x64xbf16, #tpu.memory_space<vmem>>, vector<32x32xbf16>
    %69 = vector.extract_strided_slice %51 {offsets = [0, 4], sizes = [32, 148], strides = [1, 1]} : vector<32x152xbf16> to vector<32x148xbf16>
    %cst_36 = arith.constant dense<0.000000e+00> : vector<32x148xf32>
    %70 = tpu.matmul %68, %69, %cst_36 {dimension_numbers = #tpu.dot_dimension_numbers<[1], [0], [0], [1], [0, 0, 1, 1], [], []>} : vector<32x32xbf16>, vector<32x148xbf16>, vector<32x148xf32> -> vector<32x148xf32>
    %71 = arith.addf %67, %70 : vector<32x148xf32>
    %72 = vector.broadcast %52 : vector<32x1xf32> to vector<32x148xf32>
    %73 = arith.addf %71, %72 : vector<32x148xf32>
    %cst_37 = arith.constant 0.000000e+00 : f32
    %74 = vector.broadcast %cst_37 : f32 to vector<32x148xf32>
    %75 = arith.maximumf %73, %74 : vector<32x148xf32>
    %76 = arith.truncf %75 : vector<32x148xf32> to vector<32x148xbf16>
    %c608 = arith.constant 608 : index
    %c0_38 = arith.constant 0 : index
    %77 = vector.load %arg2[%c608, %c0_38] : memref<756x64xbf16, #tpu.memory_space<vmem>>, vector<148x64xbf16>
    %cst_39 = arith.constant dense<0.000000e+00> : vector<32x64xf32>
    %78 = tpu.matmul %76, %77, %cst_39 {dimension_numbers = #tpu.dot_dimension_numbers<[1], [0], [0], [1], [0, 0, 1, 1], [], []>} : vector<32x148xbf16>, vector<148x64xbf16>, vector<32x64xf32> -> vector<32x64xf32>
    %79 = arith.truncf %78 : vector<32x64xf32> to vector<32x64xbf16>
    %c480 = arith.constant 480 : index
    %c0_40 = arith.constant 0 : index
    %80 = vector.load %arg2[%c480, %c0_40] : memref<756x64xbf16, #tpu.memory_space<vmem>>, vector<4x32xbf16>
    %81 = vector.extract_strided_slice %79 {offsets = [0, 0], sizes = [32, 8], strides = [1, 1]} : vector<32x64xbf16> to vector<32x8xbf16>
    %cst_41 = arith.constant dense<0.000000e+00> : vector<4x8xf32>
    %82 = tpu.matmul %80, %81, %cst_41 {dimension_numbers = #tpu.dot_dimension_numbers<[1], [0], [0], [1], [0, 0, 1, 1], [], []>} : vector<4x32xbf16>, vector<32x8xbf16>, vector<4x8xf32> -> vector<4x8xf32>
    %c496 = arith.constant 496 : index
    %c0_42 = arith.constant 0 : index
    %83 = vector.load %arg2[%c496, %c0_42] : memref<756x64xbf16, #tpu.memory_space<vmem>>, vector<4x32xbf16>
    %84 = vector.extract_strided_slice %79 {offsets = [0, 8], sizes = [32, 8], strides = [1, 1]} : vector<32x64xbf16> to vector<32x8xbf16>
    %cst_43 = arith.constant dense<0.000000e+00> : vector<4x8xf32>
    %85 = tpu.matmul %83, %84, %cst_43 {dimension_numbers = #tpu.dot_dimension_numbers<[1], [0], [0], [1], [0, 0, 1, 1], [], []>} : vector<4x32xbf16>, vector<32x8xbf16>, vector<4x8xf32> -> vector<4x8xf32>
    %86 = arith.addf %82, %85 : vector<4x8xf32>
    %c512 = arith.constant 512 : index
    %c0_44 = arith.constant 0 : index
    %87 = vector.load %arg2[%c512, %c0_44] : memref<756x64xbf16, #tpu.memory_space<vmem>>, vector<4x32xbf16>
    %88 = vector.extract_strided_slice %79 {offsets = [0, 16], sizes = [32, 8], strides = [1, 1]} : vector<32x64xbf16> to vector<32x8xbf16>
    %cst_45 = arith.constant dense<0.000000e+00> : vector<4x8xf32>
    %89 = tpu.matmul %87, %88, %cst_45 {dimension_numbers = #tpu.dot_dimension_numbers<[1], [0], [0], [1], [0, 0, 1, 1], [], []>} : vector<4x32xbf16>, vector<32x8xbf16>, vector<4x8xf32> -> vector<4x8xf32>
    %90 = arith.addf %86, %89 : vector<4x8xf32>
    %c528 = arith.constant 528 : index
    %c0_46 = arith.constant 0 : index
    %91 = vector.load %arg2[%c528, %c0_46] : memref<756x64xbf16, #tpu.memory_space<vmem>>, vector<4x32xbf16>
    %92 = vector.extract_strided_slice %79 {offsets = [0, 24], sizes = [32, 8], strides = [1, 1]} : vector<32x64xbf16> to vector<32x8xbf16>
    %cst_47 = arith.constant dense<0.000000e+00> : vector<4x8xf32>
    %93 = tpu.matmul %91, %92, %cst_47 {dimension_numbers = #tpu.dot_dimension_numbers<[1], [0], [0], [1], [0, 0, 1, 1], [], []>} : vector<4x32xbf16>, vector<32x8xbf16>, vector<4x8xf32> -> vector<4x8xf32>
    %94 = arith.addf %90, %93 : vector<4x8xf32>
    %c544 = arith.constant 544 : index
    %c0_48 = arith.constant 0 : index
    %95 = vector.load %arg2[%c544, %c0_48] : memref<756x64xbf16, #tpu.memory_space<vmem>>, vector<4x32xbf16>
    %96 = vector.extract_strided_slice %79 {offsets = [0, 32], sizes = [32, 8], strides = [1, 1]} : vector<32x64xbf16> to vector<32x8xbf16>
    %cst_49 = arith.constant dense<0.000000e+00> : vector<4x8xf32>
    %97 = tpu.matmul %95, %96, %cst_49 {dimension_numbers = #tpu.dot_dimension_numbers<[1], [0], [0], [1], [0, 0, 1, 1], [], []>} : vector<4x32xbf16>, vector<32x8xbf16>, vector<4x8xf32> -> vector<4x8xf32>
    %98 = arith.addf %94, %97 : vector<4x8xf32>
    %c560 = arith.constant 560 : index
    %c0_50 = arith.constant 0 : index
    %99 = vector.load %arg2[%c560, %c0_50] : memref<756x64xbf16, #tpu.memory_space<vmem>>, vector<4x32xbf16>
    %100 = vector.extract_strided_slice %79 {offsets = [0, 40], sizes = [32, 8], strides = [1, 1]} : vector<32x64xbf16> to vector<32x8xbf16>
    %cst_51 = arith.constant dense<0.000000e+00> : vector<4x8xf32>
    %101 = tpu.matmul %99, %100, %cst_51 {dimension_numbers = #tpu.dot_dimension_numbers<[1], [0], [0], [1], [0, 0, 1, 1], [], []>} : vector<4x32xbf16>, vector<32x8xbf16>, vector<4x8xf32> -> vector<4x8xf32>
    %102 = arith.addf %98, %101 : vector<4x8xf32>
    %c576 = arith.constant 576 : index
    %c0_52 = arith.constant 0 : index
    %103 = vector.load %arg2[%c576, %c0_52] : memref<756x64xbf16, #tpu.memory_space<vmem>>, vector<4x32xbf16>
    %104 = vector.extract_strided_slice %79 {offsets = [0, 48], sizes = [32, 8], strides = [1, 1]} : vector<32x64xbf16> to vector<32x8xbf16>
    %cst_53 = arith.constant dense<0.000000e+00> : vector<4x8xf32>
    %105 = tpu.matmul %103, %104, %cst_53 {dimension_numbers = #tpu.dot_dimension_numbers<[1], [0], [0], [1], [0, 0, 1, 1], [], []>} : vector<4x32xbf16>, vector<32x8xbf16>, vector<4x8xf32> -> vector<4x8xf32>
    %106 = arith.addf %102, %105 : vector<4x8xf32>
    %c592 = arith.constant 592 : index
    %c0_54 = arith.constant 0 : index
    %107 = vector.load %arg2[%c592, %c0_54] : memref<756x64xbf16, #tpu.memory_space<vmem>>, vector<4x32xbf16>
    %108 = vector.extract_strided_slice %79 {offsets = [0, 56], sizes = [32, 8], strides = [1, 1]} : vector<32x64xbf16> to vector<32x8xbf16>
    %cst_55 = arith.constant dense<0.000000e+00> : vector<4x8xf32>
    %109 = tpu.matmul %107, %108, %cst_55 {dimension_numbers = #tpu.dot_dimension_numbers<[1], [0], [0], [1], [0, 0, 1, 1], [], []>} : vector<4x32xbf16>, vector<32x8xbf16>, vector<4x8xf32> -> vector<4x8xf32>
    %110 = arith.addf %106, %109 : vector<4x8xf32>
    %c0_56 = arith.constant 0 : index
    %c3 = arith.constant 3 : index
    %111 = vector.load %arg3[%c0_56, %c3] : memref<32x4xf32, #tpu.memory_space<vmem>>, vector<4x1xf32>
    %112 = vector.broadcast %111 : vector<4x1xf32> to vector<4x8xf32>
    %113 = arith.addf %110, %112 : vector<4x8xf32>
    %114 = vector.extract_strided_slice %113 {offsets = [0, 0], sizes = [2, 8], strides = [1, 1]} : vector<4x8xf32> to vector<2x8xf32>
    %cst_57 = arith.constant dense<0xFF800000> : vector<2xf32>
    %115 = vector.multi_reduction <maximumf>, %114, %cst_57 [1] : vector<2x8xf32> to vector<2xf32>
    %116 = vector.shape_cast %115 : vector<2xf32> to vector<2x1xf32>
    %117 = vector.broadcast %116 : vector<2x1xf32> to vector<2x8xf32>
    %118 = arith.subf %114, %117 : vector<2x8xf32>
    %119 = math.exp %118 : vector<2x8xf32>
    %cst_58 = arith.constant dense<0.000000e+00> : vector<2xf32>
    %120 = vector.multi_reduction <add>, %119, %cst_58 [1] : vector<2x8xf32> to vector<2xf32>
    %121 = vector.shape_cast %120 : vector<2xf32> to vector<2x1xf32>
    %122 = tpu.reciprocal %121 : vector<2x1xf32> -> vector<2x1xf32>
    %123 = vector.broadcast %122 : vector<2x1xf32> to vector<2x8xf32>
    %124 = arith.mulf %119, %123 : vector<2x8xf32>
    %125 = vector.extract_strided_slice %113 {offsets = [2, 0], sizes = [2, 8], strides = [1, 1]} : vector<4x8xf32> to vector<2x8xf32>
    %126 = tpu.concatenate %124, %125 in 0 : vector<2x8xf32>, vector<2x8xf32> -> vector<4x8xf32>
    %cst_59 = arith.constant 0.000000e+00 : f32
    %127 = vector.broadcast %cst_59 : f32 to vector<4x120xf32>
    %128 = tpu.concatenate %126, %127 in 1 : vector<4x8xf32>, vector<4x120xf32> -> vector<4x128xf32>
    %c0_60 = arith.constant 0 : index
    %c0_61 = arith.constant 0 : index
    %129 = vector.load %arg4[%c0_60, %c0_61] : memref<4x128xf32, #tpu.memory_space<vmem>>, vector<4x128xf32>
    tpu.vector_store %arg4[%c0_60, %c0_61], %128 {strides = array<i32>} : memref<4x128xf32, #tpu.memory_space<vmem>>, vector<4x128xf32>,
    return
  }
  func.func @transform_0(%arg0: i32) -> (i32, i32) {
    %c0_i32 = arith.constant 0 : i32
    %c0_i32_0 = arith.constant 0 : i32
    %c0_i32_1 = arith.constant 0 : i32
    return %c0_i32, %c0_i32_0 : i32, i32
  }
  func.func @transform_1(%arg0: i32) -> (i32, i32) {
    %c0_i32 = arith.constant 0 : i32
    %c0_i32_0 = arith.constant 0 : i32
    %c0_i32_1 = arith.constant 0 : i32
    return %c0_i32, %c0_i32_0 : i32, i32
  }
  func.func @transform_2(%arg0: i32) -> (i32, i32) {
    %c0_i32 = arith.constant 0 : i32
    %c0_i32_0 = arith.constant 0 : i32
    %c0_i32_1 = arith.constant 0 : i32
    return %c0_i32, %c0_i32_0 : i32, i32
  }
  func.func @transform_3(%arg0: i32) -> (i32, i32) {
    %c0_i32 = arith.constant 0 : i32
    %c0_i32_0 = arith.constant 0 : i32
    %c0_i32_1 = arith.constant 0 : i32
    return %c0_i32, %c0_i32_0 : i32, i32
  }
}

</mosaic_0001>

<llo_original>
// kernel: tpu_custom_call.1
$region0: #{tpu_custom_call.1}
  #allocation0 [shape = 'u32[]', space=smem, size = 0x4, offset = 0x4, fixed_abs, tag = 'smem constant byte address 0x4 - core index']
  #allocation1 [shape = 'u32[144,128]{1,0:T(1,128)}', space=vmem, size = 0x12000, scoped, tag = 'internal scratch']
  %s0 = inlined_call_operand.vmem [shape: f32[8,160], index: 0, kind: input, shape index: {}]
  %s1 = inlined_call_operand.vmem [shape: bf16[756,64], index: 1, kind: input, shape index: {}]
  %s2 = inlined_call_operand.vmem [shape: f32[32,4], index: 2, kind: input, shape index: {}]
  %s3 = inlined_call_operand.hbm [shape: f32[4,128], index: 3, kind: output, shape index: {}]
  %s4 = sld [smem:[#allocation0]]
  $region22: #{tpu_custom_call.1} parent=0
    _
  %s6 = ssub.s32 1, %s4
  %s7 = scalar_select 0, %s6, %s4
  $region1: #{tpu_custom_call.1} parent=0
    #allocation2 [shape = 'u8[2048]{0}', space=vmem, size = 0x800, scoped, tag = 'output window, operand 0, single buffered']
    #allocation3 [shape = 's32[1]{0}', space=sflag, size = 0x4, scoped, tag = 'scoped memory for tpu_custom_call.1']
    %8 = vsyncpa [#allocation3], 0
    // Predicated region
    $region2: #{tpu_custom_call.1} parent=1 // pred_check
      _
    $region3: #{tpu_custom_call.1} parent=1 // pred_check_branch
      %10 = sbr.rel (0) target = $region5
    $region4: #{tpu_custom_call.1} parent=1 // pred_region
      _
    $region5: #{tpu_custom_call.1} parent=1 // pred_fallthru
      _
    // Predicated region
    $region6: #{tpu_custom_call.1} parent=1 // pred_check
      _
    $region7: #{tpu_custom_call.1} parent=1 // pred_check_branch
      %12 = sbr.rel (0) target = $region9
    $region8: #{tpu_custom_call.1} parent=1 // pred_region
      _
    $region9: #{tpu_custom_call.1} parent=1 // pred_fallthru
      _
    // Predicated region
    $region10: #{tpu_custom_call.1} parent=1 // pred_check
      _
    $region11: #{tpu_custom_call.1} parent=1 // pred_check_branch
      %14 = sbr.rel (0) target = $region13
    $region12: #{tpu_custom_call.1} parent=1 // pred_region
      _
    $region13: #{tpu_custom_call.1} parent=1 // pred_fallthru
      _
    %v16 = vld [vmem:[%s0] sm:$0xff]
    %v17 = vld [vmem:[%s0 + $0x8] sm:$0xff]
    %v18 = vpack.c.bf16 %v16, %v16
    %v19 = vpack.c.bf16 %v17, %v17
    %v20 = vld [vmem:[%s2] sm:$0xff]
    %v21 = vld [vmem:[%s2 + $0x8] sm:$0xff]
    %v22 = vld [vmem:[%s2 + $0x10] sm:$0xff]
    %v23 = vld [vmem:[%s2 + $0x18] sm:$0xff]
    %v24 = vld [vmem:[%s1] sm:$0xf]
    %v25 = vld [vmem:[%s1 + $0x4] sm:$0xf]
    %v26 = vld [vmem:[%s1 + $0x8] sm:$0xf]
    %v27 = vld [vmem:[%s1 + $0xc] sm:$0xf]
    %v28 = vld [vmem:[%s1 + $0x10] sm:$0xf]
    %v29 = vld [vmem:[%s1 + $0x14] sm:$0xf]
    %v30 = vld [vmem:[%s1 + $0x18] sm:$0xf]
    %v31 = vld [vmem:[%s1 + $0x1c] sm:$0xf]
    %v36 = vunpack.c.l.b16 %v28
    %v37 = vunpack.c.l.b16 %v29
    %v38 = vunpack.c.l.b16 %v30
    %v39 = vunpack.c.l.b16 %v31
    %v40 = vpack.c.b16 %v37, %v36
    %v41 = vpack.c.b16 %v39, %v38
    %44 = vrot.lane.b32.xlu0 %v18, 127
    %v45 = vpop.permute.xlu0 %44
    %46 = vrot.lane.b32.xlu0 %v19, 127
    %v47 = vpop.permute.xlu0 %46
    %vm48 = vcmask 1039360
    %v49 = vsel %vm48, %v45, %v47
    %vm50 = vcmask 64512
    %v52 = vsel %vm50, %v40, 0
    %v55 = vsel %vm50, %v41, 0
    %vm57 = vcmask 1043456
    %v59 = vsel %vm57, %v49, 0
    %v62 = vsel %vm57, %v47, 0
    %64 = vmatprep.subr.bf16.mxu0 %v62
    %65 = vmatpush1.bf16.msra.mxu0 %v59
    %66 = vmatprep.subr.bf16.mxu0 0
    %67 = vmatpush1.bf16.msra.mxu0 0
    %68 = vmatprep.subr.bf16.mxu0 0
    %69 = vmatpush1.bf16.msra.mxu0 0
    %70 = vmatprep.subr.bf16.mxu0 0
    %71 = vmatpush1.bf16.msra.mxu0 0
    %72 = vmatprep.subr.bf16.mxu0 0
    %73 = vmatpush1.bf16.msra.mxu0 0
    %74 = vmatprep.subr.bf16.mxu0 0
    %75 = vmatpush1.bf16.msra.mxu0 0
    %76 = vmatprep.subr.bf16.mxu0 0
    %77 = vmatpush1.bf16.msra.mxu0 0
    %78 = vmatprep.subr.bf16.mxu0 0
    %79 = vmatpush1.bf16.msra.mxu0 0
    %80 = vmatprep.subr.bf16.mxu0 0
    %81 = vmatpush1.bf16.msra.mxu0 0
    %82 = vmatprep.subr.bf16.mxu0 0
    %83 = vmatpush1.bf16.msra.mxu0 0
    %84 = vmatprep.subr.bf16.mxu0 0
    %85 = vmatpush1.bf16.msra.mxu0 0
    %86 = vmatprep.subr.bf16.mxu0 0
    %87 = vmatpush1.bf16.msra.mxu0 0
    %88 = vmatprep.subr.bf16.mxu0 0
    %89 = vmatpush1.bf16.msra.mxu0 0
    %90 = vmatprep.subr.bf16.mxu0 0
    %91 = vmatpush1.bf16.msra.mxu0 0
    %92 = vmatprep.subr.bf16.mxu0 0
    %93 = vmatpush1.bf16.msra.mxu0 0
    %94 = vmatprep.subr.bf16.mxu0 0
    %95 = vmatpush1.bf16.msra.mxu0 0
    %96 = vmatprep.mubr.bf16.mxu0 0
    %97 = vmatmul.mubr.bf16.gmra.mrb[0].mxu0 %v52
    %v98 = vpop.f32.mrb[0].mxu0
    %v99 = vadd.f32 0.0, %v98
    %v100 = vpop.f32.mrb[0].mxu0
    %v101 = vadd.f32 0.0, %v100
    %v102 = vpop.f32.mrb[0].mxu0
    %v103 = vadd.f32 0.0, %v102
    %v104 = vpop.f32.mrb[0].mxu0
    %v105 = vadd.f32 0.0, %v104
    %106 = vmatprep.mubr.bf16.mxu0 0
    %107 = vmatmul.mubr.bf16.gmra.mrb[0].mxu0 %v55
    %v108 = vpop.f32.mrb[0].mxu0
    %v109 = vadd.f32 0.0, %v108
    %v110 = vpop.f32.mrb[0].mxu0
    %v111 = vadd.f32 0.0, %v110
    %v112 = vpop.f32.mrb[0].mxu0
    %v113 = vadd.f32 0.0, %v112
    %v114 = vpop.f32.mrb[0].mxu0
    %v115 = vadd.f32 0.0, %v114
    %116 = vdwg.mxu0
    %v121 = vunpack.c.l.b16 %v24
    %v122 = vunpack.c.l.b16 %v25
    %v123 = vunpack.c.l.b16 %v26
    %v124 = vunpack.c.l.b16 %v27
    %v125 = vpack.c.b16 %v122, %v121
    %v126 = vpack.c.b16 %v124, %v123
    %v128 = vsel %vm50, %v125, 0
    %v131 = vsel %vm50, %v126, 0
    %v134 = vsel %vm57, %v18, 0
    %v137 = vsel %vm57, %v19, 0
    %139 = vmatprep.subr.bf16.mxu0 %v137
    %140 = vmatpush1.bf16.msra.mxu0 %v134
    %141 = vmatprep.subr.bf16.mxu0 0
    %142 = vmatpush1.bf16.msra.mxu0 0
    %143 = vmatprep.subr.bf16.mxu0 0
    %144 = vmatpush1.bf16.msra.mxu0 0
    %145 = vmatprep.subr.bf16.mxu0 0
    %146 = vmatpush1.bf16.msra.mxu0 0
    %147 = vmatprep.subr.bf16.mxu0 0
    %148 = vmatpush1.bf16.msra.mxu0 0
    %149 = vmatprep.subr.bf16.mxu0 0
    %150 = vmatpush1.bf16.msra.mxu0 0
    %151 = vmatprep.subr.bf16.mxu0 0
    %152 = vmatpush1.bf16.msra.mxu0 0
    %153 = vmatprep.subr.bf16.mxu0 0
    %154 = vmatpush1.bf16.msra.mxu0 0
    %155 = vmatprep.subr.bf16.mxu0 0
    %156 = vmatpush1.bf16.msra.mxu0 0
    %157 = vmatprep.subr.bf16.mxu0 0
    %158 = vmatpush1.bf16.msra.mxu0 0
    %159 = vmatprep.subr.bf16.mxu0 0
    %160 = vmatpush1.bf16.msra.mxu0 0
    %161 = vmatprep.subr.bf16.mxu0 0
    %162 = vmatpush1.bf16.msra.mxu0 0
    %163 = vmatprep.subr.bf16.mxu0 0
    %164 = vmatpush1.bf16.msra.mxu0 0
    %165 = vmatprep.subr.bf16.mxu0 0
    %166 = vmatpush1.bf16.msra.mxu0 0
    %167 = vmatprep.subr.bf16.mxu0 0
    %168 = vmatpush1.bf16.msra.mxu0 0
    %169 = vmatprep.subr.bf16.mxu0 0
    %170 = vmatpush1.bf16.msra.mxu0 0
    %171 = vmatprep.mubr.bf16.mxu0 0
    %172 = vmatmul.mubr.bf16.gmra.mrb[0].mxu0 %v128
    %v173 = vpop.f32.mrb[0].mxu0
    %v174 = vadd.f32 %v99, %v173
    %v175 = vpop.f32.mrb[0].mxu0
    %v176 = vadd.f32 %v101, %v175
    %v177 = vpop.f32.mrb[0].mxu0
    %v178 = vadd.f32 %v103, %v177
    %v179 = vpop.f32.mrb[0].mxu0
    %v180 = vadd.f32 %v105, %v179
    %181 = vmatprep.mubr.bf16.mxu0 0
    %182 = vmatmul.mubr.bf16.gmra.mrb[0].mxu0 %v131
    %v183 = vpop.f32.mrb[0].mxu0
    %v184 = vadd.f32 %v109, %v183
    %v185 = vpop.f32.mrb[0].mxu0
    %v186 = vadd.f32 %v111, %v185
    %v187 = vpop.f32.mrb[0].mxu0
    %v188 = vadd.f32 %v113, %v187
    %v189 = vpop.f32.mrb[0].mxu0
    %v190 = vadd.f32 %v115, %v189
    %191 = vdwg.mxu0
    %v192 = vld [vmem:[%s1 + $0x20] sm:$0xf]
    %v193 = vld [vmem:[%s1 + $0x24] sm:$0xf]
    %v194 = vld [vmem:[%s1 + $0x28] sm:$0xf]
    %v195 = vld [vmem:[%s1 + $0x2c] sm:$0xf]
    %v200 = vunpack.c.l.b16 %v192
    %v201 = vunpack.c.l.b16 %v193
    %v202 = vunpack.c.l.b16 %v194
    %v203 = vunpack.c.l.b16 %v195
    %v204 = vpack.c.b16 %v201, %v200
    %v205 = vpack.c.b16 %v203, %v202
    %206 = vrot.lane.b32.xlu0 %v18, 126
    %v207 = vpop.permute.xlu0 %206
    %208 = vrot.lane.b32.xlu0 %v19, 126
    %v209 = vpop.permute.xlu0 %208
    %vm210 = vcmask 1031168
    %v211 = vsel %vm210, %v207, %v209
    %v213 = vsel %vm50, %v204, 0
    %v216 = vsel %vm50, %v205, 0
    %v219 = vsel %vm57, %v211, 0
    %v222 = vsel %vm57, %v209, 0
    %224 = vmatprep.subr.bf16.mxu0 %v222
    %225 = vmatpush1.bf16.msra.mxu0 %v219
    %226 = vmatprep.subr.bf16.mxu0 0
    %227 = vmatpush1.bf16.msra.mxu0 0
    %228 = vmatprep.subr.bf16.mxu0 0
    %229 = vmatpush1.bf16.msra.mxu0 0
    %230 = vmatprep.subr.bf16.mxu0 0
    %231 = vmatpush1.bf16.msra.mxu0 0
    %232 = vmatprep.subr.bf16.mxu0 0
    %233 = vmatpush1.bf16.msra.mxu0 0
    %234 = vmatprep.subr.bf16.mxu0 0
    %235 = vmatpush1.bf16.msra.mxu0 0
    %236 = vmatprep.subr.bf16.mxu0 0
    %237 = vmatpush1.bf16.msra.mxu0 0
    %238 = vmatprep.subr.bf16.mxu0 0
    %239 = vmatpush1.bf16.msra.mxu0 0
    %240 = vmatprep.subr.bf16.mxu0 0
    %241 = vmatpush1.bf16.msra.mxu0 0
    %242 = vmatprep.subr.bf16.mxu0 0
    %243 = vmatpush1.bf16.msra.mxu0 0
    %244 = vmatprep.subr.bf16.mxu0 0
    %245 = vmatpush1.bf16.msra.mxu0 0
    %246 = vmatprep.subr.bf16.mxu0 0
    %247 = vmatpush1.bf16.msra.mxu0 0
    %248 = vmatprep.subr.bf16.mxu0 0
    %249 = vmatpush1.bf16.msra.mxu0 0
    %250 = vmatprep.subr.bf16.mxu0 0
    %251 = vmatpush1.bf16.msra.mxu0 0
    %252 = vmatprep.subr.bf16.mxu0 0
    %253 = vmatpush1.bf16.msra.mxu0 0
    %254 = vmatprep.subr.bf16.mxu0 0
    %255 = vmatpush1.bf16.msra.mxu0 0
    %256 = vmatprep.mubr.bf16.mxu0 0
    %257 = vmatmul.mubr.bf16.gmra.mrb[0].mxu0 %v213
    %v258 = vpop.f32.mrb[0].mxu0
    %v259 = vadd.f32 0.0, %v258
    %v260 = vpop.f32.mrb[0].mxu0
    %v261 = vadd.f32 0.0, %v260
    %v262 = vpop.f32.mrb[0].mxu0
    %v263 = vadd.f32 0.0, %v262
    %v264 = vpop.f32.mrb[0].mxu0
    %v265 = vadd.f32 0.0, %v264
    %266 = vmatprep.mubr.bf16.mxu0 0
    %267 = vmatmul.mubr.bf16.gmra.mrb[0].mxu0 %v216
    %v268 = vpop.f32.mrb[0].mxu0
    %v269 = vadd.f32 0.0, %v268
    %v270 = vpop.f32.mrb[0].mxu0
    %v271 = vadd.f32 0.0, %v270
    %v272 = vpop.f32.mrb[0].mxu0
    %v273 = vadd.f32 0.0, %v272
    %v274 = vpop.f32.mrb[0].mxu0
    %v275 = vadd.f32 0.0, %v274
    %276 = vdwg.mxu0
    %v277 = vadd.f32 %v174, %v259
    %v278 = vadd.f32 %v176, %v261
    %v279 = vadd.f32 %v178, %v263
    %v280 = vadd.f32 %v180, %v265
    %v281 = vadd.f32 %v184, %v269
    %v282 = vadd.f32 %v186, %v271
    %v283 = vadd.f32 %v188, %v273
    %v284 = vadd.f32 %v190, %v275
    %v285 = vld [vmem:[%s1 + $0x30] sm:$0xf]
    %v286 = vld [vmem:[%s1 + $0x34] sm:$0xf]
    %v287 = vld [vmem:[%s1 + $0x38] sm:$0xf]
    %v288 = vld [vmem:[%s1 + $0x3c] sm:$0xf]
    %v293 = vunpack.c.l.b16 %v285
    %v294 = vunpack.c.l.b16 %v286
    %v295 = vunpack.c.l.b16 %v287
    %v296 = vunpack.c.l.b16 %v288
    %v297 = vpack.c.b16 %v294, %v293
    %v298 = vpack.c.b16 %v296, %v295
    %299 = vrot.lane.b32.xlu0 %v18, 125
    %v300 = vpop.permute.xlu0 %299
    %301 = vrot.lane.b32.xlu0 %v19, 125
    %v302 = vpop.permute.xlu0 %301
    %vm303 = vcmask 1022976
    %v304 = vsel %vm303, %v300, %v302
    %v306 = vsel %vm50, %v297, 0
    %v309 = vsel %vm50, %v298, 0
    %v312 = vsel %vm57, %v304, 0
    %v315 = vsel %vm57, %v302, 0
    %317 = vmatprep.subr.bf16.mxu0 %v315
    %318 = vmatpush1.bf16.msra.mxu0 %v312
    %319 = vmatprep.subr.bf16.mxu0 0
    %320 = vmatpush1.bf16.msra.mxu0 0
    %321 = vmatprep.subr.bf16.mxu0 0
    %322 = vmatpush1.bf16.msra.mxu0 0
    %323 = vmatprep.subr.bf16.mxu0 0
    %324 = vmatpush1.bf16.msra.mxu0 0
    %325 = vmatprep.subr.bf16.mxu0 0
    %326 = vmatpush1.bf16.msra.mxu0 0
    %327 = vmatprep.subr.bf16.mxu0 0
    %328 = vmatpush1.bf16.msra.mxu0 0
    %329 = vmatprep.subr.bf16.mxu0 0
    %330 = vmatpush1.bf16.msra.mxu0 0
    %331 = vmatprep.subr.bf16.mxu0 0
    %332 = vmatpush1.bf16.msra.mxu0 0
    %333 = vmatprep.subr.bf16.mxu0 0
    %334 = vmatpush1.bf16.msra.mxu0 0
    %335 = vmatprep.subr.bf16.mxu0 0
    %336 = vmatpush1.bf16.msra.mxu0 0
    %337 = vmatprep.subr.bf16.mxu0 0
    %338 = vmatpush1.bf16.msra.mxu0 0
    %339 = vmatprep.subr.bf16.mxu0 0
    %340 = vmatpush1.bf16.msra.mxu0 0
    %341 = vmatprep.subr.bf16.mxu0 0
    %342 = vmatpush1.bf16.msra.mxu0 0
    %343 = vmatprep.subr.bf16.mxu0 0
    %344 = vmatpush1.bf16.msra.mxu0 0
    %345 = vmatprep.subr.bf16.mxu0 0
    %346 = vmatpush1.bf16.msra.mxu0 0
    %347 = vmatprep.subr.bf16.mxu0 0
    %348 = vmatpush1.bf16.msra.mxu0 0
    %349 = vmatprep.mubr.bf16.mxu0 0
    %350 = vmatmul.mubr.bf16.gmra.mrb[0].mxu0 %v306
    %v351 = vpop.f32.mrb[0].mxu0
    %v352 = vadd.f32 0.0, %v351
    %v353 = vpop.f32.mrb[0].mxu0
    %v354 = vadd.f32 0.0, %v353
    %v355 = vpop.f32.mrb[0].mxu0
    %v356 = vadd.f32 0.0, %v355
    %v357 = vpop.f32.mrb[0].mxu0
    %v358 = vadd.f32 0.0, %v357
    %359 = vmatprep.mubr.bf16.mxu0 0
    %360 = vmatmul.mubr.bf16.gmra.mrb[0].mxu0 %v309
    %v361 = vpop.f32.mrb[0].mxu0
    %v362 = vadd.f32 0.0, %v361
    %v363 = vpop.f32.mrb[0].mxu0
    %v364 = vadd.f32 0.0, %v363
    %v365 = vpop.f32.mrb[0].mxu0
    %v366 = vadd.f32 0.0, %v365
    %v367 = vpop.f32.mrb[0].mxu0
    %v368 = vadd.f32 0.0, %v367
    %369 = vdwg.mxu0
    %v370 = vadd.f32 %v277, %v352
    %v371 = vadd.f32 %v278, %v354
    %v372 = vadd.f32 %v279, %v356
    %v373 = vadd.f32 %v280, %v358
    %v374 = vadd.f32 %v281, %v362
    %v375 = vadd.f32 %v282, %v364
    %v376 = vadd.f32 %v283, %v366
    %v377 = vadd.f32 %v284, %v368
    %v378 = vld [vmem:[%s1 + $0x40] sm:$0xf]
    %v379 = vld [vmem:[%s1 + $0x44] sm:$0xf]
    %v380 = vld [vmem:[%s1 + $0x48] sm:$0xf]
    %v381 = vld [vmem:[%s1 + $0x4c] sm:$0xf]
    %v386 = vunpack.c.l.b16 %v378
    %v387 = vunpack.c.l.b16 %v379
    %v388 = vunpack.c.l.b16 %v380
    %v389 = vunpack.c.l.b16 %v381
    %v390 = vpack.c.b16 %v387, %v386
    %v391 = vpack.c.b16 %v389, %v388
    %392 = vrot.lane.b32.xlu0 %v18, 124
    %v393 = vpop.permute.xlu0 %392
    %394 = vrot.lane.b32.xlu0 %v19, 124
    %v395 = vpop.permute.xlu0 %394
    %vm396 = vcmask 1014784
    %v397 = vsel %vm396, %v393, %v395
    %v399 = vsel %vm50, %v390, 0
    %v402 = vsel %vm50, %v391, 0
    %v405 = vsel %vm57, %v397, 0
    %v408 = vsel %vm57, %v395, 0
    %410 = vmatprep.subr.bf16.mxu0 %v408
    %411 = vmatpush1.bf16.msra.mxu0 %v405
    %412 = vmatprep.subr.bf16.mxu0 0
    %413 = vmatpush1.bf16.msra.mxu0 0
    %414 = vmatprep.subr.bf16.mxu0 0
    %415 = vmatpush1.bf16.msra.mxu0 0
    %416 = vmatprep.subr.bf16.mxu0 0
    %417 = vmatpush1.bf16.msra.mxu0 0
    %418 = vmatprep.subr.bf16.mxu0 0
    %419 = vmatpush1.bf16.msra.mxu0 0
    %420 = vmatprep.subr.bf16.mxu0 0
    %421 = vmatpush1.bf16.msra.mxu0 0
    %422 = vmatprep.subr.bf16.mxu0 0
    %423 = vmatpush1.bf16.msra.mxu0 0
    %424 = vmatprep.subr.bf16.mxu0 0
    %425 = vmatpush1.bf16.msra.mxu0 0
    %426 = vmatprep.subr.bf16.mxu0 0
    %427 = vmatpush1.bf16.msra.mxu0 0
    %428 = vmatprep.subr.bf16.mxu0 0
    %429 = vmatpush1.bf16.msra.mxu0 0
    %430 = vmatprep.subr.bf16.mxu0 0
    %431 = vmatpush1.bf16.msra.mxu0 0
    %432 = vmatprep.subr.bf16.mxu0 0
    %433 = vmatpush1.bf16.msra.mxu0 0
    %434 = vmatprep.subr.bf16.mxu0 0
    %435 = vmatpush1.bf16.msra.mxu0 0
    %436 = vmatprep.subr.bf16.mxu0 0
    %437 = vmatpush1.bf16.msra.mxu0 0
    %438 = vmatprep.subr.bf16.mxu0 0
    %439 = vmatpush1.bf16.msra.mxu0 0
    %440 = vmatprep.subr.bf16.mxu0 0
    %441 = vmatpush1.bf16.msra.mxu0 0
    %442 = vmatprep.mubr.bf16.mxu0 0
    %443 = vmatmul.mubr.bf16.gmra.mrb[0].mxu0 %v399
    %v444 = vpop.f32.mrb[0].mxu0
    %v445 = vadd.f32 0.0, %v444
    %v446 = vpop.f32.mrb[0].mxu0
    %v447 = vadd.f32 0.0, %v446
    %v448 = vpop.f32.mrb[0].mxu0
    %v449 = vadd.f32 0.0, %v448
    %v450 = vpop.f32.mrb[0].mxu0
    %v451 = vadd.f32 0.0, %v450
    %452 = vmatprep.mubr.bf16.mxu0 0
    %453 = vmatmul.mubr.bf16.gmra.mrb[0].mxu0 %v402
    %v454 = vpop.f32.mrb[0].mxu0
    %v455 = vadd.f32 0.0, %v454
    %v456 = vpop.f32.mrb[0].mxu0
    %v457 = vadd.f32 0.0, %v456
    %v458 = vpop.f32.mrb[0].mxu0
    %v459 = vadd.f32 0.0, %v458
    %v460 = vpop.f32.mrb[0].mxu0
    %v461 = vadd.f32 0.0, %v460
    %462 = vdwg.mxu0
    %v463 = vadd.f32 %v370, %v445
    %v464 = vadd.f32 %v371, %v447
    %v465 = vadd.f32 %v372, %v449
    %v466 = vadd.f32 %v373, %v451
    %v467 = vadd.f32 %v374, %v455
    %v468 = vadd.f32 %v375, %v457
    %v469 = vadd.f32 %v376, %v459
    %v470 = vadd.f32 %v377, %v461
    %472 = vset.pattern.permute.xlu0 0
    %473 = vperm.xlu0 %472, %v20
    %v474 = vpop.permute.xlu0 %473
    %477 = vset.pattern.permute.xlu0 0
    %478 = vperm.xlu0 %477, %v21
    %v479 = vpop.permute.xlu0 %478
    %482 = vset.pattern.permute.xlu0 0
    %483 = vperm.xlu0 %482, %v22
    %v484 = vpop.permute.xlu0 %483
    %487 = vset.pattern.permute.xlu0 0
    %488 = vperm.xlu0 %487, %v23
    %v489 = vpop.permute.xlu0 %488
    %v491 = vadd.f32 %v463, %v474
    %v492 = vadd.f32 %v464, %v474
    %v493 = vadd.f32 %v465, %v479
    %v494 = vadd.f32 %v466, %v479
    %v495 = vadd.f32 %v467, %v484
    %v496 = vadd.f32 %v468, %v484
    %v497 = vadd.f32 %v469, %v489
    %v498 = vadd.f32 %v470, %v489
    %v499 = vmax.f32 %v491, 0.0
    %v500 = vmax.f32 %v492, 0.0
    %v501 = vmax.f32 %v493, 0.0
    %v502 = vmax.f32 %v494, 0.0
    %v503 = vmax.f32 %v495, 0.0
    %v504 = vmax.f32 %v496, 0.0
    %v505 = vmax.f32 %v497, 0.0
    %v506 = vmax.f32 %v498, 0.0
    %v507 = vpack.c.bf16 %v501, %v499
    %v508 = vpack.c.bf16 %v502, %v500
    %v509 = vpack.c.bf16 %v505, %v503
    %v510 = vpack.c.bf16 %v506, %v504
    %v511 = vld [vmem:[%s1 + $0x50] sm:$0xf]
    %v512 = vld [vmem:[%s1 + $0x54] sm:$0xf]
    %v513 = vld [vmem:[%s1 + $0x58] sm:$0xf]
    %v514 = vld [vmem:[%s1 + $0x5c] sm:$0xf]
    %v515 = vld [vmem:[%s1 + $0x60] sm:$0xf]
    %v516 = vld [vmem:[%s1 + $0x64] sm:$0xf]
    %v517 = vld [vmem:[%s1 + $0x68] sm:$0xf]
    %v518 = vld [vmem:[%s1 + $0x6c] sm:$0xf]
    %v523 = vunpack.c.l.b16 %v515
    %v524 = vunpack.c.l.b16 %v516
    %v525 = vunpack.c.l.b16 %v517
    %v526 = vunpack.c.l.b16 %v518
    %v527 = vpack.c.b16 %v524, %v523
    %v528 = vpack.c.b16 %v526, %v525
    %533 = vrot.lane.b32.xlu0 %v507, 127
    %v534 = vpop.permute.xlu0 %533
    %535 = vrot.lane.b32.xlu0 %v508, 127
    %v536 = vpop.permute.xlu0 %535
    %537 = vrot.lane.b32.xlu0 %v509, 127
    %v538 = vpop.permute.xlu0 %537
    %539 = vrot.lane.b32.xlu0 %v510, 127
    %v540 = vpop.permute.xlu0 %539
    %v541 = vsel %vm48, %v534, %v536
    %v542 = vsel %vm48, %v538, %v540
    %vm547 = vcmask 261120
    %v549 = vsel %vm547, %v527, 0
    %v552 = vsel %vm547, %v528, 0
    %554 = vmatprep.subr.bf16.mxu0 %v536
    %555 = vmatpush1.bf16.msra.mxu0 %v541
    %556 = vmatprep.subr.bf16.mxu0 %v540
    %557 = vmatpush1.bf16.msra.mxu0 %v542
    %558 = vmatprep.subr.bf16.mxu0 0
    %559 = vmatpush1.bf16.msra.mxu0 0
    %560 = vmatprep.subr.bf16.mxu0 0
    %561 = vmatpush1.bf16.msra.mxu0 0
    %562 = vmatprep.subr.bf16.mxu0 0
    %563 = vmatpush1.bf16.msra.mxu0 0
    %564 = vmatprep.subr.bf16.mxu0 0
    %565 = vmatpush1.bf16.msra.mxu0 0
    %566 = vmatprep.subr.bf16.mxu0 0
    %567 = vmatpush1.bf16.msra.mxu0 0
    %568 = vmatprep.subr.bf16.mxu0 0
    %569 = vmatpush1.bf16.msra.mxu0 0
    %570 = vmatprep.subr.bf16.mxu0 0
    %571 = vmatpush1.bf16.msra.mxu0 0
    %572 = vmatprep.subr.bf16.mxu0 0
    %573 = vmatpush1.bf16.msra.mxu0 0
    %574 = vmatprep.subr.bf16.mxu0 0
    %575 = vmatpush1.bf16.msra.mxu0 0
    %576 = vmatprep.subr.bf16.mxu0 0
    %577 = vmatpush1.bf16.msra.mxu0 0
    %578 = vmatprep.subr.bf16.mxu0 0
    %579 = vmatpush1.bf16.msra.mxu0 0
    %580 = vmatprep.subr.bf16.mxu0 0
    %581 = vmatpush1.bf16.msra.mxu0 0
    %582 = vmatprep.subr.bf16.mxu0 0
    %583 = vmatpush1.bf16.msra.mxu0 0
    %584 = vmatprep.subr.bf16.mxu0 0
    %585 = vmatpush1.bf16.msra.mxu0 0
    %586 = vmatprep.mubr.bf16.mxu0 0
    %587 = vmatmul.mubr.bf16.gmra.mrb[0].mxu0 %v549
    %v588 = vpop.f32.mrb[0].mxu0
    %v589 = vadd.f32 0.0, %v588
    %v590 = vpop.f32.mrb[0].mxu0
    %v591 = vadd.f32 0.0, %v590
    %v592 = vpop.f32.mrb[0].mxu0
    %v593 = vadd.f32 0.0, %v592
    %v594 = vpop.f32.mrb[0].mxu0
    %v595 = vadd.f32 0.0, %v594
    %596 = vmatprep.mubr.bf16.mxu0 0
    %597 = vmatmul.mubr.bf16.gmra.mrb[0].mxu0 %v552
    %v598 = vpop.f32.mrb[0].mxu0
    %v599 = vadd.f32 0.0, %v598
    %v600 = vpop.f32.mrb[0].mxu0
    %v601 = vadd.f32 0.0, %v600
    %v602 = vpop.f32.mrb[0].mxu0
    %v603 = vadd.f32 0.0, %v602
    %v604 = vpop.f32.mrb[0].mxu0
    %v605 = vadd.f32 0.0, %v604
    %606 = vdwg.mxu0
    %v611 = vunpack.c.l.b16 %v511
    %v612 = vunpack.c.l.b16 %v512
    %v613 = vunpack.c.l.b16 %v513
    %v614 = vunpack.c.l.b16 %v514
    %v615 = vpack.c.b16 %v612, %v611
    %v616 = vpack.c.b16 %v614, %v613
    %v618 = vsel %vm547, %v615, 0
    %v621 = vsel %vm547, %v616, 0
    %623 = vmatprep.subr.bf16.mxu0 %v508
    %624 = vmatpush1.bf16.msra.mxu0 %v507
    %625 = vmatprep.subr.bf16.mxu0 %v510
    %626 = vmatpush1.bf16.msra.mxu0 %v509
    %627 = vmatprep.subr.bf16.mxu0 0
    %628 = vmatpush1.bf16.msra.mxu0 0
    %629 = vmatprep.subr.bf16.mxu0 0
    %630 = vmatpush1.bf16.msra.mxu0 0
    %631 = vmatprep.subr.bf16.mxu0 0
    %632 = vmatpush1.bf16.msra.mxu0 0
    %633 = vmatprep.subr.bf16.mxu0 0
    %634 = vmatpush1.bf16.msra.mxu0 0
    %635 = vmatprep.subr.bf16.mxu0 0
    %636 = vmatpush1.bf16.msra.mxu0 0
    %637 = vmatprep.subr.bf16.mxu0 0
    %638 = vmatpush1.bf16.msra.mxu0 0
    %639 = vmatprep.subr.bf16.mxu0 0
    %640 = vmatpush1.bf16.msra.mxu0 0
    %641 = vmatprep.subr.bf16.mxu0 0
    %642 = vmatpush1.bf16.msra.mxu0 0
    %643 = vmatprep.subr.bf16.mxu0 0
    %644 = vmatpush1.bf16.msra.mxu0 0
    %645 = vmatprep.subr.bf16.mxu0 0
    %646 = vmatpush1.bf16.msra.mxu0 0
    %647 = vmatprep.subr.bf16.mxu0 0
    %648 = vmatpush1.bf16.msra.mxu0 0
    %649 = vmatprep.subr.bf16.mxu0 0
    %650 = vmatpush1.bf16.msra.mxu0 0
    %651 = vmatprep.subr.bf16.mxu0 0
    %652 = vmatpush1.bf16.msra.mxu0 0
    %653 = vmatprep.subr.bf16.mxu0 0
    %654 = vmatpush1.bf16.msra.mxu0 0
    %655 = vmatprep.mubr.bf16.mxu0 0
    %656 = vmatmul.mubr.bf16.gmra.mrb[0].mxu0 %v618
    %v657 = vpop.f32.mrb[0].mxu0
    %v658 = vadd.f32 %v589, %v657
    %v659 = vpop.f32.mrb[0].mxu0
    %v660 = vadd.f32 %v591, %v659
    %v661 = vpop.f32.mrb[0].mxu0
    %v662 = vadd.f32 %v593, %v661
    %v663 = vpop.f32.mrb[0].mxu0
    %v664 = vadd.f32 %v595, %v663
    %665 = vmatprep.mubr.bf16.mxu0 0
    %666 = vmatmul.mubr.bf16.gmra.mrb[0].mxu0 %v621
    %v667 = vpop.f32.mrb[0].mxu0
    %v668 = vadd.f32 %v599, %v667
    %v669 = vpop.f32.mrb[0].mxu0
    %v670 = vadd.f32 %v601, %v669
    %v671 = vpop.f32.mrb[0].mxu0
    %v672 = vadd.f32 %v603, %v671
    %v673 = vpop.f32.mrb[0].mxu0
    %v674 = vadd.f32 %v605, %v673
    %675 = vdwg.mxu0
    %v676 = vld [vmem:[%s1 + $0x70] sm:$0xf]
    %v677 = vld [vmem:[%s1 + $0x74] sm:$0xf]
    %v678 = vld [vmem:[%s1 + $0x78] sm:$0xf]
    %v679 = vld [vmem:[%s1 + $0x7c] sm:$0xf]
    %v684 = vunpack.c.l.b16 %v676
    %v685 = vunpack.c.l.b16 %v677
    %v686 = vunpack.c.l.b16 %v678
    %v687 = vunpack.c.l.b16 %v679
    %v688 = vpack.c.b16 %v685, %v684
    %v689 = vpack.c.b16 %v687, %v686
    %690 = vrot.lane.b32.xlu0 %v507, 126
    %v691 = vpop.permute.xlu0 %690
    %692 = vrot.lane.b32.xlu0 %v508, 126
    %v693 = vpop.permute.xlu0 %692
    %694 = vrot.lane.b32.xlu0 %v509, 126
    %v695 = vpop.permute.xlu0 %694
    %696 = vrot.lane.b32.xlu0 %v510, 126
    %v697 = vpop.permute.xlu0 %696
    %v698 = vsel %vm210, %v691, %v693
    %v699 = vsel %vm210, %v695, %v697
    %v705 = vsel %vm547, %v688, 0
    %v708 = vsel %vm547, %v689, 0
    %710 = vmatprep.subr.bf16.mxu0 %v693
    %711 = vmatpush1.bf16.msra.mxu0 %v698
    %712 = vmatprep.subr.bf16.mxu0 %v697
    %713 = vmatpush1.bf16.msra.mxu0 %v699
    %714 = vmatprep.subr.bf16.mxu0 0
    %715 = vmatpush1.bf16.msra.mxu0 0
    %716 = vmatprep.subr.bf16.mxu0 0
    %717 = vmatpush1.bf16.msra.mxu0 0
    %718 = vmatprep.subr.bf16.mxu0 0
    %719 = vmatpush1.bf16.msra.mxu0 0
    %720 = vmatprep.subr.bf16.mxu0 0
    %721 = vmatpush1.bf16.msra.mxu0 0
    %722 = vmatprep.subr.bf16.mxu0 0
    %723 = vmatpush1.bf16.msra.mxu0 0
    %724 = vmatprep.subr.bf16.mxu0 0
    %725 = vmatpush1.bf16.msra.mxu0 0
    %726 = vmatprep.subr.bf16.mxu0 0
    %727 = vmatpush1.bf16.msra.mxu0 0
    %728 = vmatprep.subr.bf16.mxu0 0
    %729 = vmatpush1.bf16.msra.mxu0 0
    %730 = vmatprep.subr.bf16.mxu0 0
    %731 = vmatpush1.bf16.msra.mxu0 0
    %732 = vmatprep.subr.bf16.mxu0 0
    %733 = vmatpush1.bf16.msra.mxu0 0
    %734 = vmatprep.subr.bf16.mxu0 0
    %735 = vmatpush1.bf16.msra.mxu0 0
    %736 = vmatprep.subr.bf16.mxu0 0
    %737 = vmatpush1.bf16.msra.mxu0 0
    %738 = vmatprep.subr.bf16.mxu0 0
    %739 = vmatpush1.bf16.msra.mxu0 0
    %740 = vmatprep.subr.bf16.mxu0 0
    %741 = vmatpush1.bf16.msra.mxu0 0
    %742 = vmatprep.mubr.bf16.mxu0 0
    %743 = vmatmul.mubr.bf16.gmra.mrb[0].mxu0 %v705
    %v744 = vpop.f32.mrb[0].mxu0
    %v745 = vadd.f32 0.0, %v744
    %v746 = vpop.f32.mrb[0].mxu0
    %v747 = vadd.f32 0.0, %v746
    %v748 = vpop.f32.mrb[0].mxu0
    %v749 = vadd.f32 0.0, %v748
    %v750 = vpop.f32.mrb[0].mxu0
    %v751 = vadd.f32 0.0, %v750
    %752 = vmatprep.mubr.bf16.mxu0 0
    %753 = vmatmul.mubr.bf16.gmra.mrb[0].mxu0 %v708
    %v754 = vpop.f32.mrb[0].mxu0
    %v755 = vadd.f32 0.0, %v754
    %v756 = vpop.f32.mrb[0].mxu0
    %v757 = vadd.f32 0.0, %v756
    %v758 = vpop.f32.mrb[0].mxu0
    %v759 = vadd.f32 0.0, %v758
    %v760 = vpop.f32.mrb[0].mxu0
    %v761 = vadd.f32 0.0, %v760
    %762 = vdwg.mxu0
    %v763 = vadd.f32 %v658, %v745
    %v764 = vadd.f32 %v660, %v747
    %v765 = vadd.f32 %v662, %v749
    %v766 = vadd.f32 %v664, %v751
    %v767 = vadd.f32 %v668, %v755
    %v768 = vadd.f32 %v670, %v757
    %v769 = vadd.f32 %v672, %v759
    %v770 = vadd.f32 %v674, %v761
    %v771 = vld [vmem:[%s1 + $0x80] sm:$0xf]
    %v772 = vld [vmem:[%s1 + $0x84] sm:$0xf]
    %v773 = vld [vmem:[%s1 + $0x88] sm:$0xf]
    %v774 = vld [vmem:[%s1 + $0x8c] sm:$0xf]
    %v779 = vunpack.c.l.b16 %v771
    %v780 = vunpack.c.l.b16 %v772
    %v781 = vunpack.c.l.b16 %v773
    %v782 = vunpack.c.l.b16 %v774
    %v783 = vpack.c.b16 %v780, %v779
    %v784 = vpack.c.b16 %v782, %v781
    %785 = vrot.lane.b32.xlu0 %v507, 125
    %v786 = vpop.permute.xlu0 %785
    %787 = vrot.lane.b32.xlu0 %v508, 125
    %v788 = vpop.permute.xlu0 %787
    %789 = vrot.lane.b32.xlu0 %v509, 125
    %v790 = vpop.permute.xlu0 %789
    %791 = vrot.lane.b32.xlu0 %v510, 125
    %v792 = vpop.permute.xlu0 %791
    %v793 = vsel %vm303, %v786, %v788
    %v794 = vsel %vm303, %v790, %v792
    %v800 = vsel %vm547, %v783, 0
    %v803 = vsel %vm547, %v784, 0
    %805 = vmatprep.subr.bf16.mxu0 %v788
    %806 = vmatpush1.bf16.msra.mxu0 %v793
    %807 = vmatprep.subr.bf16.mxu0 %v792
    %808 = vmatpush1.bf16.msra.mxu0 %v794
    %809 = vmatprep.subr.bf16.mxu0 0
    %810 = vmatpush1.bf16.msra.mxu0 0
    %811 = vmatprep.subr.bf16.mxu0 0
    %812 = vmatpush1.bf16.msra.mxu0 0
    %813 = vmatprep.subr.bf16.mxu0 0
    %814 = vmatpush1.bf16.msra.mxu0 0
    %815 = vmatprep.subr.bf16.mxu0 0
    %816 = vmatpush1.bf16.msra.mxu0 0
    %817 = vmatprep.subr.bf16.mxu0 0
    %818 = vmatpush1.bf16.msra.mxu0 0
    %819 = vmatprep.subr.bf16.mxu0 0
    %820 = vmatpush1.bf16.msra.mxu0 0
    %821 = vmatprep.subr.bf16.mxu0 0
    %822 = vmatpush1.bf16.msra.mxu0 0
    %823 = vmatprep.subr.bf16.mxu0 0
    %824 = vmatpush1.bf16.msra.mxu0 0
    %825 = vmatprep.subr.bf16.mxu0 0
    %826 = vmatpush1.bf16.msra.mxu0 0
    %827 = vmatprep.subr.bf16.mxu0 0
    %828 = vmatpush1.bf16.msra.mxu0 0
    %829 = vmatprep.subr.bf16.mxu0 0
    %830 = vmatpush1.bf16.msra.mxu0 0
    %831 = vmatprep.subr.bf16.mxu0 0
    %832 = vmatpush1.bf16.msra.mxu0 0
    %833 = vmatprep.subr.bf16.mxu0 0
    %834 = vmatpush1.bf16.msra.mxu0 0
    %835 = vmatprep.subr.bf16.mxu0 0
    %836 = vmatpush1.bf16.msra.mxu0 0
    %837 = vmatprep.mubr.bf16.mxu0 0
    %838 = vmatmul.mubr.bf16.gmra.mrb[0].mxu0 %v800
    %v839 = vpop.f32.mrb[0].mxu0
    %v840 = vadd.f32 0.0, %v839
    %v841 = vpop.f32.mrb[0].mxu0
    %v842 = vadd.f32 0.0, %v841
    %v843 = vpop.f32.mrb[0].mxu0
    %v844 = vadd.f32 0.0, %v843
    %v845 = vpop.f32.mrb[0].mxu0
    %v846 = vadd.f32 0.0, %v845
    %847 = vmatprep.mubr.bf16.mxu0 0
    %848 = vmatmul.mubr.bf16.gmra.mrb[0].mxu0 %v803
    %v849 = vpop.f32.mrb[0].mxu0
    %v850 = vadd.f32 0.0, %v849
    %v851 = vpop.f32.mrb[0].mxu0
    %v852 = vadd.f32 0.0, %v851
    %v853 = vpop.f32.mrb[0].mxu0
    %v854 = vadd.f32 0.0, %v853
    %v855 = vpop.f32.mrb[0].mxu0
    %v856 = vadd.f32 0.0, %v855
    %857 = vdwg.mxu0
    %v858 = vadd.f32 %v763, %v840
    %v859 = vadd.f32 %v764, %v842
    %v860 = vadd.f32 %v765, %v844
    %v861 = vadd.f32 %v766, %v846
    %v862 = vadd.f32 %v767, %v850
    %v863 = vadd.f32 %v768, %v852
    %v864 = vadd.f32 %v769, %v854
    %v865 = vadd.f32 %v770, %v856
    %v866 = vld [vmem:[%s1 + $0x90] sm:$0xf]
    %v867 = vld [vmem:[%s1 + $0x94] sm:$0xf]
    %v868 = vld [vmem:[%s1 + $0x98] sm:$0xf]
    %v869 = vld [vmem:[%s1 + $0x9c] sm:$0xf]
    %v874 = vunpack.c.l.b16 %v866
    %v875 = vunpack.c.l.b16 %v867
    %v876 = vunpack.c.l.b16 %v868
    %v877 = vunpack.c.l.b16 %v869
    %v878 = vpack.c.b16 %v875, %v874
    %v879 = vpack.c.b16 %v877, %v876
    %880 = vrot.lane.b32.xlu0 %v507, 124
    %v881 = vpop.permute.xlu0 %880
    %882 = vrot.lane.b32.xlu0 %v508, 124
    %v883 = vpop.permute.xlu0 %882
    %884 = vrot.lane.b32.xlu0 %v509, 124
    %v885 = vpop.permute.xlu0 %884
    %886 = vrot.lane.b32.xlu0 %v510, 124
    %v887 = vpop.permute.xlu0 %886
    %v888 = vsel %vm396, %v881, %v883
    %v889 = vsel %vm396, %v885, %v887
    %v895 = vsel %vm547, %v878, 0
    %v898 = vsel %vm547, %v879, 0
    %900 = vmatprep.subr.bf16.mxu0 %v883
    %901 = vmatpush1.bf16.msra.mxu0 %v888
    %902 = vmatprep.subr.bf16.mxu0 %v887
    %903 = vmatpush1.bf16.msra.mxu0 %v889
    %904 = vmatprep.subr.bf16.mxu0 0
    %905 = vmatpush1.bf16.msra.mxu0 0
    %906 = vmatprep.subr.bf16.mxu0 0
    %907 = vmatpush1.bf16.msra.mxu0 0
    %908 = vmatprep.subr.bf16.mxu0 0
    %909 = vmatpush1.bf16.msra.mxu0 0
    %910 = vmatprep.subr.bf16.mxu0 0
    %911 = vmatpush1.bf16.msra.mxu0 0
    %912 = vmatprep.subr.bf16.mxu0 0
    %913 = vmatpush1.bf16.msra.mxu0 0
    %914 = vmatprep.subr.bf16.mxu0 0
    %915 = vmatpush1.bf16.msra.mxu0 0
    %916 = vmatprep.subr.bf16.mxu0 0
    %917 = vmatpush1.bf16.msra.mxu0 0
    %918 = vmatprep.subr.bf16.mxu0 0
    %919 = vmatpush1.bf16.msra.mxu0 0
    %920 = vmatprep.subr.bf16.mxu0 0
    %921 = vmatpush1.bf16.msra.mxu0 0
    %922 = vmatprep.subr.bf16.mxu0 0
    %923 = vmatpush1.bf16.msra.mxu0 0
    %924 = vmatprep.subr.bf16.mxu0 0
    %925 = vmatpush1.bf16.msra.mxu0 0
    %926 = vmatprep.subr.bf16.mxu0 0
    %927 = vmatpush1.bf16.msra.mxu0 0
    %928 = vmatprep.subr.bf16.mxu0 0
    %929 = vmatpush1.bf16.msra.mxu0 0
    %930 = vmatprep.subr.bf16.mxu0 0
    %931 = vmatpush1.bf16.msra.mxu0 0
    %932 = vmatprep.mubr.bf16.mxu0 0
    %933 = vmatmul.mubr.bf16.gmra.mrb[0].mxu0 %v895
    %v934 = vpop.f32.mrb[0].mxu0
    %v935 = vadd.f32 0.0, %v934
    %v936 = vpop.f32.mrb[0].mxu0
    %v937 = vadd.f32 0.0, %v936
    %v938 = vpop.f32.mrb[0].mxu0
    %v939 = vadd.f32 0.0, %v938
    %v940 = vpop.f32.mrb[0].mxu0
    %v941 = vadd.f32 0.0, %v940
    %942 = vmatprep.mubr.bf16.mxu0 0
    %943 = vmatmul.mubr.bf16.gmra.mrb[0].mxu0 %v898
    %v944 = vpop.f32.mrb[0].mxu0
    %v945 = vadd.f32 0.0, %v944
    %v946 = vpop.f32.mrb[0].mxu0
    %v947 = vadd.f32 0.0, %v946
    %v948 = vpop.f32.mrb[0].mxu0
    %v949 = vadd.f32 0.0, %v948
    %v950 = vpop.f32.mrb[0].mxu0
    %v951 = vadd.f32 0.0, %v950
    %952 = vdwg.mxu0
    %v953 = vadd.f32 %v858, %v935
    %v954 = vadd.f32 %v859, %v937
    %v955 = vadd.f32 %v860, %v939
    %v956 = vadd.f32 %v861, %v941
    %v957 = vadd.f32 %v862, %v945
    %v958 = vadd.f32 %v863, %v947
    %v959 = vadd.f32 %v864, %v949
    %v960 = vadd.f32 %v865, %v951
    %961 = vset.pattern.permute.xlu0 1
    %962 = vperm.xlu0 %961, %v20
    %v963 = vpop.permute.xlu0 %962
    %965 = vset.pattern.permute.xlu0 1
    %966 = vperm.xlu0 %965, %v21
    %v967 = vpop.permute.xlu0 %966
    %969 = vset.pattern.permute.xlu0 1
    %970 = vperm.xlu0 %969, %v22
    %v971 = vpop.permute.xlu0 %970
    %973 = vset.pattern.permute.xlu0 1
    %974 = vperm.xlu0 %973, %v23
    %v975 = vpop.permute.xlu0 %974
    %v977 = vadd.f32 %v953, %v963
    %v978 = vadd.f32 %v954, %v963
    %v979 = vadd.f32 %v955, %v967
    %v980 = vadd.f32 %v956, %v967
    %v981 = vadd.f32 %v957, %v971
    %v982 = vadd.f32 %v958, %v971
    %v983 = vadd.f32 %v959, %v975
    %v984 = vadd.f32 %v960, %v975
    %v985 = vmax.f32 %v977, 0.0
    %v986 = vmax.f32 %v978, 0.0
    %v987 = vmax.f32 %v979, 0.0
    %v988 = vmax.f32 %v980, 0.0
    %v989 = vmax.f32 %v981, 0.0
    %v990 = vmax.f32 %v982, 0.0
    %v991 = vmax.f32 %v983, 0.0
    %v992 = vmax.f32 %v984, 0.0
    %v993 = vpack.c.bf16 %v987, %v985
    %v994 = vpack.c.bf16 %v988, %v986
    %v995 = vpack.c.bf16 %v991, %v989
    %v996 = vpack.c.bf16 %v992, %v990
    %v997 = vld [vmem:[%s1 + $0xa0] sm:$0xf]
    %v998 = vld [vmem:[%s1 + $0xa4] sm:$0xf]
    %v999 = vld [vmem:[%s1 + $0xa8] sm:$0xf]
    %v1000 = vld [vmem:[%s1 + $0xac] sm:$0xf]
    %v1001 = vld [vmem:[%s1 + $0xb0] sm:$0xf]
    %v1002 = vld [vmem:[%s1 + $0xb4] sm:$0xf]
    %v1003 = vld [vmem:[%s1 + $0xb8] sm:$0xf]
    %v1004 = vld [vmem:[%s1 + $0xbc] sm:$0xf]
    %v1009 = vunpack.c.l.b16 %v1001
    %v1010 = vunpack.c.l.b16 %v1002
    %v1011 = vunpack.c.l.b16 %v1003
    %v1012 = vunpack.c.l.b16 %v1004
    %v1013 = vpack.c.b16 %v1010, %v1009
    %v1014 = vpack.c.b16 %v1012, %v1011
    %1019 = vrot.lane.b32.xlu0 %v993, 127
    %v1020 = vpop.permute.xlu0 %1019
    %1021 = vrot.lane.b32.xlu0 %v994, 127
    %v1022 = vpop.permute.xlu0 %1021
    %1023 = vrot.lane.b32.xlu0 %v995, 127
    %v1024 = vpop.permute.xlu0 %1023
    %1025 = vrot.lane.b32.xlu0 %v996, 127
    %v1026 = vpop.permute.xlu0 %1025
    %v1027 = vsel %vm48, %v1020, %v1022
    %v1028 = vsel %vm48, %v1024, %v1026
    %v1034 = vsel %vm547, %v1013, 0
    %v1037 = vsel %vm547, %v1014, 0
    %1039 = vmatprep.subr.bf16.mxu0 %v1022
    %1040 = vmatpush1.bf16.msra.mxu0 %v1027
    %1041 = vmatprep.subr.bf16.mxu0 %v1026
    %1042 = vmatpush1.bf16.msra.mxu0 %v1028
    %1043 = vmatprep.subr.bf16.mxu0 0
    %1044 = vmatpush1.bf16.msra.mxu0 0
    %1045 = vmatprep.subr.bf16.mxu0 0
    %1046 = vmatpush1.bf16.msra.mxu0 0
    %1047 = vmatprep.subr.bf16.mxu0 0
    %1048 = vmatpush1.bf16.msra.mxu0 0
    %1049 = vmatprep.subr.bf16.mxu0 0
    %1050 = vmatpush1.bf16.msra.mxu0 0
    %1051 = vmatprep.subr.bf16.mxu0 0
    %1052 = vmatpush1.bf16.msra.mxu0 0
    %1053 = vmatprep.subr.bf16.mxu0 0
    %1054 = vmatpush1.bf16.msra.mxu0 0
    %1055 = vmatprep.subr.bf16.mxu0 0
    %1056 = vmatpush1.bf16.msra.mxu0 0
    %1057 = vmatprep.subr.bf16.mxu0 0
    %1058 = vmatpush1.bf16.msra.mxu0 0
    %1059 = vmatprep.subr.bf16.mxu0 0
    %1060 = vmatpush1.bf16.msra.mxu0 0
    %1061 = vmatprep.subr.bf16.mxu0 0
    %1062 = vmatpush1.bf16.msra.mxu0 0
    %1063 = vmatprep.subr.bf16.mxu0 0
    %1064 = vmatpush1.bf16.msra.mxu0 0
    %1065 = vmatprep.subr.bf16.mxu0 0
    %1066 = vmatpush1.bf16.msra.mxu0 0
    %1067 = vmatprep.subr.bf16.mxu0 0
    %1068 = vmatpush1.bf16.msra.mxu0 0
    %1069 = vmatprep.subr.bf16.mxu0 0
    %1070 = vmatpush1.bf16.msra.mxu0 0
    %1071 = vmatprep.mubr.bf16.mxu0 0
    %1072 = vmatmul.mubr.bf16.gmra.mrb[0].mxu0 %v1034
    %v1073 = vpop.f32.mrb[0].mxu0
    %v1074 = vadd.f32 0.0, %v1073
    %v1075 = vpop.f32.mrb[0].mxu0
    %v1076 = vadd.f32 0.0, %v1075
    %v1077 = vpop.f32.mrb[0].mxu0
    %v1078 = vadd.f32 0.0, %v1077
    %v1079 = vpop.f32.mrb[0].mxu0
    %v1080 = vadd.f32 0.0, %v1079
    %1081 = vmatprep.mubr.bf16.mxu0 0
    %1082 = vmatmul.mubr.bf16.gmra.mrb[0].mxu0 %v1037
    %v1083 = vpop.f32.mrb[0].mxu0
    %v1084 = vadd.f32 0.0, %v1083
    %v1085 = vpop.f32.mrb[0].mxu0
    %v1086 = vadd.f32 0.0, %v1085
    %v1087 = vpop.f32.mrb[0].mxu0
    %v1088 = vadd.f32 0.0, %v1087
    %v1089 = vpop.f32.mrb[0].mxu0
    %v1090 = vadd.f32 0.0, %v1089
    %1091 = vdwg.mxu0
    %v1096 = vunpack.c.l.b16 %v997
    %v1097 = vunpack.c.l.b16 %v998
    %v1098 = vunpack.c.l.b16 %v999
    %v1099 = vunpack.c.l.b16 %v1000
    %v1100 = vpack.c.b16 %v1097, %v1096
    %v1101 = vpack.c.b16 %v1099, %v1098
    %v1103 = vsel %vm547, %v1100, 0
    %v1106 = vsel %vm547, %v1101, 0
    %1108 = vmatprep.subr.bf16.mxu0 %v994
    %1109 = vmatpush1.bf16.msra.mxu0 %v993
    %1110 = vmatprep.subr.bf16.mxu0 %v996
    %1111 = vmatpush1.bf16.msra.mxu0 %v995
    %1112 = vmatprep.subr.bf16.mxu0 0
    %1113 = vmatpush1.bf16.msra.mxu0 0
    %1114 = vmatprep.subr.bf16.mxu0 0
    %1115 = vmatpush1.bf16.msra.mxu0 0
    %1116 = vmatprep.subr.bf16.mxu0 0
    %1117 = vmatpush1.bf16.msra.mxu0 0
    %1118 = vmatprep.subr.bf16.mxu0 0
    %1119 = vmatpush1.bf16.msra.mxu0 0
    %1120 = vmatprep.subr.bf16.mxu0 0
    %1121 = vmatpush1.bf16.msra.mxu0 0
    %1122 = vmatprep.subr.bf16.mxu0 0
    %1123 = vmatpush1.bf16.msra.mxu0 0
    %1124 = vmatprep.subr.bf16.mxu0 0
    %1125 = vmatpush1.bf16.msra.mxu0 0
    %1126 = vmatprep.subr.bf16.mxu0 0
    %1127 = vmatpush1.bf16.msra.mxu0 0
    %1128 = vmatprep.subr.bf16.mxu0 0
    %1129 = vmatpush1.bf16.msra.mxu0 0
    %1130 = vmatprep.subr.bf16.mxu0 0
    %1131 = vmatpush1.bf16.msra.mxu0 0
    %1132 = vmatprep.subr.bf16.mxu0 0
    %1133 = vmatpush1.bf16.msra.mxu0 0
    %1134 = vmatprep.subr.bf16.mxu0 0
    %1135 = vmatpush1.bf16.msra.mxu0 0
    %1136 = vmatprep.subr.bf16.mxu0 0
    %1137 = vmatpush1.bf16.msra.mxu0 0
    %1138 = vmatprep.subr.bf16.mxu0 0
    %1139 = vmatpush1.bf16.msra.mxu0 0
    %1140 = vmatprep.mubr.bf16.mxu0 0
    %1141 = vmatmul.mubr.bf16.gmra.mrb[0].mxu0 %v1103
    %v1142 = vpop.f32.mrb[0].mxu0
    %v1143 = vadd.f32 %v1074, %v1142
    %v1144 = vpop.f32.mrb[0].mxu0
    %v1145 = vadd.f32 %v1076, %v1144
    %v1146 = vpop.f32.mrb[0].mxu0
    %v1147 = vadd.f32 %v1078, %v1146
    %v1148 = vpop.f32.mrb[0].mxu0
    %v1149 = vadd.f32 %v1080, %v1148
    %1150 = vmatprep.mubr.bf16.mxu0 0
    %1151 = vmatmul.mubr.bf16.gmra.mrb[0].mxu0 %v1106
    %v1152 = vpop.f32.mrb[0].mxu0
    %v1153 = vadd.f32 %v1084, %v1152
    %v1154 = vpop.f32.mrb[0].mxu0
    %v1155 = vadd.f32 %v1086, %v1154
    %v1156 = vpop.f32.mrb[0].mxu0
    %v1157 = vadd.f32 %v1088, %v1156
    %v1158 = vpop.f32.mrb[0].mxu0
    %v1159 = vadd.f32 %v1090, %v1158
    %1160 = vdwg.mxu0
    %v1161 = vld [vmem:[%s1 + $0xc0] sm:$0xf]
    %v1162 = vld [vmem:[%s1 + $0xc4] sm:$0xf]
    %v1163 = vld [vmem:[%s1 + $0xc8] sm:$0xf]
    %v1164 = vld [vmem:[%s1 + $0xcc] sm:$0xf]
    %v1169 = vunpack.c.l.b16 %v1161
    %v1170 = vunpack.c.l.b16 %v1162
    %v1171 = vunpack.c.l.b16 %v1163
    %v1172 = vunpack.c.l.b16 %v1164
    %v1173 = vpack.c.b16 %v1170, %v1169
    %v1174 = vpack.c.b16 %v1172, %v1171
    %1175 = vrot.lane.b32.xlu0 %v993, 126
    %v1176 = vpop.permute.xlu0 %1175
    %1177 = vrot.lane.b32.xlu0 %v994, 126
    %v1178 = vpop.permute.xlu0 %1177
    %1179 = vrot.lane.b32.xlu0 %v995, 126
    %v1180 = vpop.permute.xlu0 %1179
    %1181 = vrot.lane.b32.xlu0 %v996, 126
    %v1182 = vpop.permute.xlu0 %1181
    %v1183 = vsel %vm210, %v1176, %v1178
    %v1184 = vsel %vm210, %v1180, %v1182
    %v1190 = vsel %vm547, %v1173, 0
    %v1193 = vsel %vm547, %v1174, 0
    %1195 = vmatprep.subr.bf16.mxu0 %v1178
    %1196 = vmatpush1.bf16.msra.mxu0 %v1183
    %1197 = vmatprep.subr.bf16.mxu0 %v1182
    %1198 = vmatpush1.bf16.msra.mxu0 %v1184
    %1199 = vmatprep.subr.bf16.mxu0 0
    %1200 = vmatpush1.bf16.msra.mxu0 0
    %1201 = vmatprep.subr.bf16.mxu0 0
    %1202 = vmatpush1.bf16.msra.mxu0 0
    %1203 = vmatprep.subr.bf16.mxu0 0
    %1204 = vmatpush1.bf16.msra.mxu0 0
    %1205 = vmatprep.subr.bf16.mxu0 0
    %1206 = vmatpush1.bf16.msra.mxu0 0
    %1207 = vmatprep.subr.bf16.mxu0 0
    %1208 = vmatpush1.bf16.msra.mxu0 0
    %1209 = vmatprep.subr.bf16.mxu0 0
    %1210 = vmatpush1.bf16.msra.mxu0 0
    %1211 = vmatprep.subr.bf16.mxu0 0
    %1212 = vmatpush1.bf16.msra.mxu0 0
    %1213 = vmatprep.subr.bf16.mxu0 0
    %1214 = vmatpush1.bf16.msra.mxu0 0
    %1215 = vmatprep.subr.bf16.mxu0 0
    %1216 = vmatpush1.bf16.msra.mxu0 0
    %1217 = vmatprep.subr.bf16.mxu0 0
    %1218 = vmatpush1.bf16.msra.mxu0 0
    %1219 = vmatprep.subr.bf16.mxu0 0
    %1220 = vmatpush1.bf16.msra.mxu0 0
    %1221 = vmatprep.subr.bf16.mxu0 0
    %1222 = vmatpush1.bf16.msra.mxu0 0
    %1223 = vmatprep.subr.bf16.mxu0 0
    %1224 = vmatpush1.bf16.msra.mxu0 0
    %1225 = vmatprep.subr.bf16.mxu0 0
    %1226 = vmatpush1.bf16.msra.mxu0 0
    %1227 = vmatprep.mubr.bf16.mxu0 0
    %1228 = vmatmul.mubr.bf16.gmra.mrb[0].mxu0 %v1190
    %v1229 = vpop.f32.mrb[0].mxu0
    %v1230 = vadd.f32 0.0, %v1229
    %v1231 = vpop.f32.mrb[0].mxu0
    %v1232 = vadd.f32 0.0, %v1231
    %v1233 = vpop.f32.mrb[0].mxu0
    %v1234 = vadd.f32 0.0, %v1233
    %v1235 = vpop.f32.mrb[0].mxu0
    %v1236 = vadd.f32 0.0, %v1235
    %1237 = vmatprep.mubr.bf16.mxu0 0
    %1238 = vmatmul.mubr.bf16.gmra.mrb[0].mxu0 %v1193
    %v1239 = vpop.f32.mrb[0].mxu0
    %v1240 = vadd.f32 0.0, %v1239
    %v1241 = vpop.f32.mrb[0].mxu0
    %v1242 = vadd.f32 0.0, %v1241
    %v1243 = vpop.f32.mrb[0].mxu0
    %v1244 = vadd.f32 0.0, %v1243
    %v1245 = vpop.f32.mrb[0].mxu0
    %v1246 = vadd.f32 0.0, %v1245
    %1247 = vdwg.mxu0
    %v1248 = vadd.f32 %v1143, %v1230
    %v1249 = vadd.f32 %v1145, %v1232
    %v1250 = vadd.f32 %v1147, %v1234
    %v1251 = vadd.f32 %v1149, %v1236
    %v1252 = vadd.f32 %v1153, %v1240
    %v1253 = vadd.f32 %v1155, %v1242
    %v1254 = vadd.f32 %v1157, %v1244
    %v1255 = vadd.f32 %v1159, %v1246
    %v1256 = vld [vmem:[%s1 + $0xd0] sm:$0xf]
    %v1257 = vld [vmem:[%s1 + $0xd4] sm:$0xf]
    %v1258 = vld [vmem:[%s1 + $0xd8] sm:$0xf]
    %v1259 = vld [vmem:[%s1 + $0xdc] sm:$0xf]
    %v1264 = vunpack.c.l.b16 %v1256
    %v1265 = vunpack.c.l.b16 %v1257
    %v1266 = vunpack.c.l.b16 %v1258
    %v1267 = vunpack.c.l.b16 %v1259
    %v1268 = vpack.c.b16 %v1265, %v1264
    %v1269 = vpack.c.b16 %v1267, %v1266
    %1270 = vrot.lane.b32.xlu0 %v993, 125
    %v1271 = vpop.permute.xlu0 %1270
    %1272 = vrot.lane.b32.xlu0 %v994, 125
    %v1273 = vpop.permute.xlu0 %1272
    %1274 = vrot.lane.b32.xlu0 %v995, 125
    %v1275 = vpop.permute.xlu0 %1274
    %1276 = vrot.lane.b32.xlu0 %v996, 125
    %v1277 = vpop.permute.xlu0 %1276
    %v1278 = vsel %vm303, %v1271, %v1273
    %v1279 = vsel %vm303, %v1275, %v1277
    %v1285 = vsel %vm547, %v1268, 0
    %v1288 = vsel %vm547, %v1269, 0
    %1290 = vmatprep.subr.bf16.mxu0 %v1273
    %1291 = vmatpush1.bf16.msra.mxu0 %v1278
    %1292 = vmatprep.subr.bf16.mxu0 %v1277
    %1293 = vmatpush1.bf16.msra.mxu0 %v1279
    %1294 = vmatprep.subr.bf16.mxu0 0
    %1295 = vmatpush1.bf16.msra.mxu0 0
    %1296 = vmatprep.subr.bf16.mxu0 0
    %1297 = vmatpush1.bf16.msra.mxu0 0
    %1298 = vmatprep.subr.bf16.mxu0 0
    %1299 = vmatpush1.bf16.msra.mxu0 0
    %1300 = vmatprep.subr.bf16.mxu0 0
    %1301 = vmatpush1.bf16.msra.mxu0 0
    %1302 = vmatprep.subr.bf16.mxu0 0
    %1303 = vmatpush1.bf16.msra.mxu0 0
    %1304 = vmatprep.subr.bf16.mxu0 0
    %1305 = vmatpush1.bf16.msra.mxu0 0
    %1306 = vmatprep.subr.bf16.mxu0 0
    %1307 = vmatpush1.bf16.msra.mxu0 0
    %1308 = vmatprep.subr.bf16.mxu0 0
    %1309 = vmatpush1.bf16.msra.mxu0 0
    %1310 = vmatprep.subr.bf16.mxu0 0
    %1311 = vmatpush1.bf16.msra.mxu0 0
    %1312 = vmatprep.subr.bf16.mxu0 0
    %1313 = vmatpush1.bf16.msra.mxu0 0
    %1314 = vmatprep.subr.bf16.mxu0 0
    %1315 = vmatpush1.bf16.msra.mxu0 0
    %1316 = vmatprep.subr.bf16.mxu0 0
    %1317 = vmatpush1.bf16.msra.mxu0 0
    %1318 = vmatprep.subr.bf16.mxu0 0
    %1319 = vmatpush1.bf16.msra.mxu0 0
    %1320 = vmatprep.subr.bf16.mxu0 0
    %1321 = vmatpush1.bf16.msra.mxu0 0
    %1322 = vmatprep.mubr.bf16.mxu0 0
    %1323 = vmatmul.mubr.bf16.gmra.mrb[0].mxu0 %v1285
    %v1324 = vpop.f32.mrb[0].mxu0
    %v1325 = vadd.f32 0.0, %v1324
    %v1326 = vpop.f32.mrb[0].mxu0
    %v1327 = vadd.f32 0.0, %v1326
    %v1328 = vpop.f32.mrb[0].mxu0
    %v1329 = vadd.f32 0.0, %v1328
    %v1330 = vpop.f32.mrb[0].mxu0
    %v1331 = vadd.f32 0.0, %v1330
    %1332 = vmatprep.mubr.bf16.mxu0 0
    %1333 = vmatmul.mubr.bf16.gmra.mrb[0].mxu0 %v1288
    %v1334 = vpop.f32.mrb[0].mxu0
    %v1335 = vadd.f32 0.0, %v1334
    %v1336 = vpop.f32.mrb[0].mxu0
    %v1337 = vadd.f32 0.0, %v1336
    %v1338 = vpop.f32.mrb[0].mxu0
    %v1339 = vadd.f32 0.0, %v1338
    %v1340 = vpop.f32.mrb[0].mxu0
    %v1341 = vadd.f32 0.0, %v1340
    %1342 = vdwg.mxu0
    %v1343 = vadd.f32 %v1248, %v1325
    %v1344 = vadd.f32 %v1249, %v1327
    %v1345 = vadd.f32 %v1250, %v1329
    %v1346 = vadd.f32 %v1251, %v1331
    %v1347 = vadd.f32 %v1252, %v1335
    %v1348 = vadd.f32 %v1253, %v1337
    %v1349 = vadd.f32 %v1254, %v1339
    %v1350 = vadd.f32 %v1255, %v1341
    %v1351 = vld [vmem:[%s1 + $0xe0] sm:$0xf]
    %v1352 = vld [vmem:[%s1 + $0xe4] sm:$0xf]
    %v1353 = vld [vmem:[%s1 + $0xe8] sm:$0xf]
    %v1354 = vld [vmem:[%s1 + $0xec] sm:$0xf]
    %v1359 = vunpack.c.l.b16 %v1351
    %v1360 = vunpack.c.l.b16 %v1352
    %v1361 = vunpack.c.l.b16 %v1353
    %v1362 = vunpack.c.l.b16 %v1354
    %v1363 = vpack.c.b16 %v1360, %v1359
    %v1364 = vpack.c.b16 %v1362, %v1361
    %1365 = vrot.lane.b32.xlu0 %v993, 124
    %v1366 = vpop.permute.xlu0 %1365
    %1367 = vrot.lane.b32.xlu0 %v994, 124
    %v1368 = vpop.permute.xlu0 %1367
    %1369 = vrot.lane.b32.xlu0 %v995, 124
    %v1370 = vpop.permute.xlu0 %1369
    %1371 = vrot.lane.b32.xlu0 %v996, 124
    %v1372 = vpop.permute.xlu0 %1371
    %v1373 = vsel %vm396, %v1366, %v1368
    %v1374 = vsel %vm396, %v1370, %v1372
    %v1380 = vsel %vm547, %v1363, 0
    %v1383 = vsel %vm547, %v1364, 0
    %1385 = vmatprep.subr.bf16.mxu0 %v1368
    %1386 = vmatpush1.bf16.msra.mxu0 %v1373
    %1387 = vmatprep.subr.bf16.mxu0 %v1372
    %1388 = vmatpush1.bf16.msra.mxu0 %v1374
    %1389 = vmatprep.subr.bf16.mxu0 0
    %1390 = vmatpush1.bf16.msra.mxu0 0
    %1391 = vmatprep.subr.bf16.mxu0 0
    %1392 = vmatpush1.bf16.msra.mxu0 0
    %1393 = vmatprep.subr.bf16.mxu0 0
    %1394 = vmatpush1.bf16.msra.mxu0 0
    %1395 = vmatprep.subr.bf16.mxu0 0
    %1396 = vmatpush1.bf16.msra.mxu0 0
    %1397 = vmatprep.subr.bf16.mxu0 0
    %1398 = vmatpush1.bf16.msra.mxu0 0
    %1399 = vmatprep.subr.bf16.mxu0 0
    %1400 = vmatpush1.bf16.msra.mxu0 0
    %1401 = vmatprep.subr.bf16.mxu0 0
    %1402 = vmatpush1.bf16.msra.mxu0 0
    %1403 = vmatprep.subr.bf16.mxu0 0
    %1404 = vmatpush1.bf16.msra.mxu0 0
    %1405 = vmatprep.subr.bf16.mxu0 0
    %1406 = vmatpush1.bf16.msra.mxu0 0
    %1407 = vmatprep.subr.bf16.mxu0 0
    %1408 = vmatpush1.bf16.msra.mxu0 0
    %1409 = vmatprep.subr.bf16.mxu0 0
    %1410 = vmatpush1.bf16.msra.mxu0 0
    %1411 = vmatprep.subr.bf16.mxu0 0
    %1412 = vmatpush1.bf16.msra.mxu0 0
    %1413 = vmatprep.subr.bf16.mxu0 0
    %1414 = vmatpush1.bf16.msra.mxu0 0
    %1415 = vmatprep.subr.bf16.mxu0 0
    %1416 = vmatpush1.bf16.msra.mxu0 0
    %1417 = vmatprep.mubr.bf16.mxu0 0
    %1418 = vmatmul.mubr.bf16.gmra.mrb[0].mxu0 %v1380
    %v1419 = vpop.f32.mrb[0].mxu0
    %v1420 = vadd.f32 0.0, %v1419
    %v1421 = vpop.f32.mrb[0].mxu0
    %v1422 = vadd.f32 0.0, %v1421
    %v1423 = vpop.f32.mrb[0].mxu0
    %v1424 = vadd.f32 0.0, %v1423
    %v1425 = vpop.f32.mrb[0].mxu0
    %v1426 = vadd.f32 0.0, %v1425
    %1427 = vmatprep.mubr.bf16.mxu0 0
    %1428 = vmatmul.mubr.bf16.gmra.mrb[0].mxu0 %v1383
    %v1429 = vpop.f32.mrb[0].mxu0
    %v1430 = vadd.f32 0.0, %v1429
    %v1431 = vpop.f32.mrb[0].mxu0
    %v1432 = vadd.f32 0.0, %v1431
    %v1433 = vpop.f32.mrb[0].mxu0
    %v1434 = vadd.f32 0.0, %v1433
    %v1435 = vpop.f32.mrb[0].mxu0
    %v1436 = vadd.f32 0.0, %v1435
    %1437 = vdwg.mxu0
    %v1438 = vadd.f32 %v1343, %v1420
    %v1439 = vadd.f32 %v1344, %v1422
    %v1440 = vadd.f32 %v1345, %v1424
    %v1441 = vadd.f32 %v1346, %v1426
    %v1442 = vadd.f32 %v1347, %v1430
    %v1443 = vadd.f32 %v1348, %v1432
    %v1444 = vadd.f32 %v1349, %v1434
    %v1445 = vadd.f32 %v1350, %v1436
    %1446 = vset.pattern.permute.xlu0 2
    %1447 = vperm.xlu0 %1446, %v20
    %v1448 = vpop.permute.xlu0 %1447
    %1450 = vset.pattern.permute.xlu0 2
    %1451 = vperm.xlu0 %1450, %v21
    %v1452 = vpop.permute.xlu0 %1451
    %1454 = vset.pattern.permute.xlu0 2
    %1455 = vperm.xlu0 %1454, %v22
    %v1456 = vpop.permute.xlu0 %1455
    %1458 = vset.pattern.permute.xlu0 2
    %1459 = vperm.xlu0 %1458, %v23
    %v1460 = vpop.permute.xlu0 %1459
    %v1462 = vadd.f32 %v1438, %v1448
    %v1463 = vadd.f32 %v1439, %v1448
    %v1464 = vadd.f32 %v1440, %v1452
    %v1465 = vadd.f32 %v1441, %v1452
    %v1466 = vadd.f32 %v1442, %v1456
    %v1467 = vadd.f32 %v1443, %v1456
    %v1468 = vadd.f32 %v1444, %v1460
    %v1469 = vadd.f32 %v1445, %v1460
    %v1470 = vmax.f32 %v1462, 0.0
    %v1471 = vmax.f32 %v1463, 0.0
    %v1472 = vmax.f32 %v1464, 0.0
    %v1473 = vmax.f32 %v1465, 0.0
    %v1474 = vmax.f32 %v1466, 0.0
    %v1475 = vmax.f32 %v1467, 0.0
    %v1476 = vmax.f32 %v1468, 0.0
    %v1477 = vmax.f32 %v1469, 0.0
    %v1478 = vpack.c.bf16 %v1472, %v1470
    %v1479 = vpack.c.bf16 %v1473, %v1471
    %v1480 = vpack.c.bf16 %v1476, %v1474
    %v1481 = vpack.c.bf16 %v1477, %v1475
    %v1482 = vld [vmem:[%s1 + $0x130] sm:$0xf]
    %v1483 = vld [vmem:[%s1 + $0x134] sm:$0xf]
    %v1484 = vld [vmem:[%s1 + $0x138] sm:$0xf]
    %v1485 = vld [vmem:[%s1 + $0x13c] sm:$0xf]
    %v1486 = vld [vmem:[%s1 + $0x140] sm:$0xf]
    %v1487 = vld [vmem:[%s1 + $0x144] sm:$0xf]
    %v1488 = vld [vmem:[%s1 + $0x148] sm:$0xf]
    %v1489 = vld [vmem:[%s1 + $0x14c] sm:$0xf]
    %v1490 = vld [vmem:[%s1 + $0x150] sm:$0xf]
    %v1491 = vld [vmem:[%s1 + $0x154] sm:$0xf]
    %v1492 = vld [vmem:[%s1 + $0x158] sm:$0xf]
    %v1493 = vld [vmem:[%s1 + $0x15c] sm:$0xf]
    %v1494 = vld [vmem:[%s1 + $0x160] sm:$0xf]
    %v1495 = vld [vmem:[%s1 + $0x164] sm:$0xf]
    %v1496 = vld [vmem:[%s1 + $0x168] sm:$0xf]
    %v1497 = vld [vmem:[%s1 + $0x16c] sm:$0xf]
    %v1498 = vld [vmem:[%s1 + $0x170] sm:$0xf]
    %v1499 = vld [vmem:[%s1 + $0x174] sm:$0xf]
    %v1500 = vld [vmem:[%s1 + $0x178] sm:$0x3]
    %v1520 = vunpack.c.l.b16 %v1482
    %v1521 = vunpack.c.l.b16 %v1483
    %v1522 = vunpack.c.l.b16 %v1484
    %v1523 = vunpack.c.l.b16 %v1485
    %v1524 = vunpack.c.l.b16 %v1486
    %v1525 = vunpack.c.l.b16 %v1487
    %v1526 = vunpack.c.l.b16 %v1488
    %v1527 = vunpack.c.l.b16 %v1489
    %v1528 = vunpack.c.l.b16 %v1490
    %v1529 = vunpack.c.l.b16 %v1491
    %v1530 = vunpack.c.l.b16 %v1492
    %v1531 = vunpack.c.l.b16 %v1493
    %v1532 = vunpack.c.l.b16 %v1494
    %v1533 = vunpack.c.l.b16 %v1495
    %v1534 = vunpack.c.l.b16 %v1496
    %v1535 = vunpack.c.l.b16 %v1497
    %v1536 = vunpack.c.l.b16 %v1498
    %v1537 = vunpack.c.l.b16 %v1499
    %v1538 = vunpack.c.l.b16 %v1500
    %v1539 = vpack.c.b16 %v1521, %v1520
    %v1540 = vpack.c.b16 %v1523, %v1522
    %v1541 = vpack.c.b16 %v1525, %v1524
    %v1542 = vpack.c.b16 %v1527, %v1526
    %v1543 = vpack.c.b16 %v1529, %v1528
    %v1544 = vpack.c.b16 %v1531, %v1530
    %v1545 = vpack.c.b16 %v1533, %v1532
    %v1546 = vpack.c.b16 %v1535, %v1534
    %v1547 = vpack.c.b16 %v1537, %v1536
    %v1548 = vpack.c.b16 %v1538, %v1538
    %vm1558 = vcmask 162816
    %v1560 = vsel %vm1558, %v1479, 0
    %v1563 = vsel %vm1558, %v1481, 0
    %vm1565 = vcmask 1041408
    %v1567 = vsel %vm1565, %v1548, 0
    %1569 = vmatprep.subr.bf16.mxu0 0
    %1570 = vmatpush1.bf16.msra.mxu0 %v1539
    %1571 = vmatprep.subr.bf16.mxu0 0
    %1572 = vmatpush1.bf16.msra.mxu0 %v1540
    %1573 = vmatprep.subr.bf16.mxu0 0
    %1574 = vmatpush1.bf16.msra.mxu0 %v1541
    %1575 = vmatprep.subr.bf16.mxu0 0
    %1576 = vmatpush1.bf16.msra.mxu0 %v1542
    %1577 = vmatprep.subr.bf16.mxu0 0
    %1578 = vmatpush1.bf16.msra.mxu0 %v1543
    %1579 = vmatprep.subr.bf16.mxu0 0
    %1580 = vmatpush1.bf16.msra.mxu0 %v1544
    %1581 = vmatprep.subr.bf16.mxu0 0
    %1582 = vmatpush1.bf16.msra.mxu0 %v1545
    %1583 = vmatprep.subr.bf16.mxu0 0
    %1584 = vmatpush1.bf16.msra.mxu0 %v1546
    %1585 = vmatprep.subr.bf16.mxu0 0
    %1586 = vmatpush1.bf16.msra.mxu0 %v1547
    %1587 = vmatprep.subr.bf16.mxu0 0
    %1588 = vmatpush1.bf16.msra.mxu0 %v1567
    %1589 = vmatprep.subr.bf16.mxu0 0
    %1590 = vmatpush1.bf16.msra.mxu0 0
    %1591 = vmatprep.subr.bf16.mxu0 0
    %1592 = vmatpush1.bf16.msra.mxu0 0
    %1593 = vmatprep.subr.bf16.mxu0 0
    %1594 = vmatpush1.bf16.msra.mxu0 0
    %1595 = vmatprep.subr.bf16.mxu0 0
    %1596 = vmatpush1.bf16.msra.mxu0 0
    %1597 = vmatprep.subr.bf16.mxu0 0
    %1598 = vmatpush1.bf16.msra.mxu0 0
    %1599 = vmatprep.subr.bf16.mxu0 0
    %1600 = vmatpush1.bf16.msra.mxu0 0
    %1601 = vmatprep.mubr.bf16.mxu0 %v1560
    %1602 = vmatmul.mubr.bf16.gmra.mrb[0].mxu0 %v1478
    %v1603 = vpop.f32.mrb[0].mxu0
    %v1604 = vadd.f32 0.0, %v1603
    %v1605 = vpop.f32.mrb[0].mxu0
    %v1606 = vpop.f32.mrb[0].mxu0
    %v1607 = vadd.f32 0.0, %v1606
    %v1608 = vpop.f32.mrb[0].mxu0
    %1609 = vmatprep.mubr.bf16.mxu0 %v1563
    %1610 = vmatmul.mubr.bf16.gmra.mrb[0].mxu0 %v1480
    %v1611 = vpop.f32.mrb[0].mxu0
    %v1612 = vadd.f32 0.0, %v1611
    %v1613 = vpop.f32.mrb[0].mxu0
    %v1614 = vpop.f32.mrb[0].mxu0
    %v1615 = vadd.f32 0.0, %v1614
    %v1616 = vpop.f32.mrb[0].mxu0
    %1617 = vdwg.mxu0
    %v1618 = vpack.c.bf16 %v1607, %v1604
    %v1619 = vpack.c.bf16 %v1615, %v1612
    %v1620 = vld [vmem:[%s1 + $0xf0] sm:$0x3]
    %v1621 = vld [vmem:[%s1 + $0xf8] sm:$0x3]
    %1624 = vrot.lane.b32.xlu0 %v1618, 120
    %v1625 = vpop.permute.xlu0 %1624
    %1626 = vrot.lane.b32.xlu0 %v1619, 120
    %v1627 = vpop.permute.xlu0 %1626
    %v1631 = vsel %vm547, %v1621, 0
    %1633 = vmatprep.subr.bf16.mxu0 0
    %1634 = vmatpush1.bf16.msra.mxu0 %v1625
    %1635 = vmatprep.subr.bf16.mxu0 0
    %1636 = vmatpush1.bf16.msra.mxu0 %v1627
    %1637 = vmatprep.subr.bf16.mxu0 0
    %1638 = vmatpush1.bf16.msra.mxu0 0
    %1639 = vmatprep.subr.bf16.mxu0 0
    %1640 = vmatpush1.bf16.msra.mxu0 0
    %1641 = vmatprep.subr.bf16.mxu0 0
    %1642 = vmatpush1.bf16.msra.mxu0 0
    %1643 = vmatprep.subr.bf16.mxu0 0
    %1644 = vmatpush1.bf16.msra.mxu0 0
    %1645 = vmatprep.subr.bf16.mxu0 0
    %1646 = vmatpush1.bf16.msra.mxu0 0
    %1647 = vmatprep.subr.bf16.mxu0 0
    %1648 = vmatpush1.bf16.msra.mxu0 0
    %1649 = vmatprep.subr.bf16.mxu0 0
    %1650 = vmatpush1.bf16.msra.mxu0 0
    %1651 = vmatprep.subr.bf16.mxu0 0
    %1652 = vmatpush1.bf16.msra.mxu0 0
    %1653 = vmatprep.subr.bf16.mxu0 0
    %1654 = vmatpush1.bf16.msra.mxu0 0
    %1655 = vmatprep.subr.bf16.mxu0 0
    %1656 = vmatpush1.bf16.msra.mxu0 0
    %1657 = vmatprep.subr.bf16.mxu0 0
    %1658 = vmatpush1.bf16.msra.mxu0 0
    %1659 = vmatprep.subr.bf16.mxu0 0
    %1660 = vmatpush1.bf16.msra.mxu0 0
    %1661 = vmatprep.subr.bf16.mxu0 0
    %1662 = vmatpush1.bf16.msra.mxu0 0
    %1663 = vmatprep.subr.bf16.mxu0 0
    %1664 = vmatpush1.bf16.msra.mxu0 0
    %1665 = vmatprep.mubr.bf16.mxu0 0
    %1666 = vmatmul.mubr.bf16.gmra.mrb[0].mxu0 %v1631
    %v1667 = vpop.f32.mrb[0].mxu0
    %v1668 = vadd.f32 0.0, %v1667
    %v1669 = vpop.f32.mrb[0].mxu0
    %v1670 = vpop.f32.mrb[0].mxu0
    %v1671 = vpop.f32.mrb[0].mxu0
    %1672 = vdwg.mxu0
    %v1674 = vsel %vm547, %v1620, 0
    %1676 = vmatprep.subr.bf16.mxu0 0
    %1677 = vmatpush1.bf16.msra.mxu0 %v1618
    %1678 = vmatprep.subr.bf16.mxu0 0
    %1679 = vmatpush1.bf16.msra.mxu0 %v1619
    %1680 = vmatprep.subr.bf16.mxu0 0
    %1681 = vmatpush1.bf16.msra.mxu0 0
    %1682 = vmatprep.subr.bf16.mxu0 0
    %1683 = vmatpush1.bf16.msra.mxu0 0
    %1684 = vmatprep.subr.bf16.mxu0 0
    %1685 = vmatpush1.bf16.msra.mxu0 0
    %1686 = vmatprep.subr.bf16.mxu0 0
    %1687 = vmatpush1.bf16.msra.mxu0 0
    %1688 = vmatprep.subr.bf16.mxu0 0
    %1689 = vmatpush1.bf16.msra.mxu0 0
    %1690 = vmatprep.subr.bf16.mxu0 0
    %1691 = vmatpush1.bf16.msra.mxu0 0
    %1692 = vmatprep.subr.bf16.mxu0 0
    %1693 = vmatpush1.bf16.msra.mxu0 0
    %1694 = vmatprep.subr.bf16.mxu0 0
    %1695 = vmatpush1.bf16.msra.mxu0 0
    %1696 = vmatprep.subr.bf16.mxu0 0
    %1697 = vmatpush1.bf16.msra.mxu0 0
    %1698 = vmatprep.subr.bf16.mxu0 0
    %1699 = vmatpush1.bf16.msra.mxu0 0
    %1700 = vmatprep.subr.bf16.mxu0 0
    %1701 = vmatpush1.bf16.msra.mxu0 0
    %1702 = vmatprep.subr.bf16.mxu0 0
    %1703 = vmatpush1.bf16.msra.mxu0 0
    %1704 = vmatprep.subr.bf16.mxu0 0
    %1705 = vmatpush1.bf16.msra.mxu0 0
    %1706 = vmatprep.subr.bf16.mxu0 0
    %1707 = vmatpush1.bf16.msra.mxu0 0
    %1708 = vmatprep.mubr.bf16.mxu0 0
    %1709 = vmatmul.mubr.bf16.gmra.mrb[0].mxu0 %v1674
    %v1710 = vpop.f32.mrb[0].mxu0
    %v1711 = vadd.f32 %v1668, %v1710
    %v1712 = vpop.f32.mrb[0].mxu0
    %v1713 = vpop.f32.mrb[0].mxu0
    %v1714 = vpop.f32.mrb[0].mxu0
    %1715 = vdwg.mxu0
    %v1716 = vld [vmem:[%s1 + $0x100] sm:$0x3]
    %1717 = vrot.lane.b32.xlu0 %v1618, 112
    %v1718 = vpop.permute.xlu0 %1717
    %1719 = vrot.lane.b32.xlu0 %v1619, 112
    %v1720 = vpop.permute.xlu0 %1719
    %v1724 = vsel %vm547, %v1716, 0
    %1726 = vmatprep.subr.bf16.mxu0 0
    %1727 = vmatpush1.bf16.msra.mxu0 %v1718
    %1728 = vmatprep.subr.bf16.mxu0 0
    %1729 = vmatpush1.bf16.msra.mxu0 %v1720
    %1730 = vmatprep.subr.bf16.mxu0 0
    %1731 = vmatpush1.bf16.msra.mxu0 0
    %1732 = vmatprep.subr.bf16.mxu0 0
    %1733 = vmatpush1.bf16.msra.mxu0 0
    %1734 = vmatprep.subr.bf16.mxu0 0
    %1735 = vmatpush1.bf16.msra.mxu0 0
    %1736 = vmatprep.subr.bf16.mxu0 0
    %1737 = vmatpush1.bf16.msra.mxu0 0
    %1738 = vmatprep.subr.bf16.mxu0 0
    %1739 = vmatpush1.bf16.msra.mxu0 0
    %1740 = vmatprep.subr.bf16.mxu0 0
    %1741 = vmatpush1.bf16.msra.mxu0 0
    %1742 = vmatprep.subr.bf16.mxu0 0
    %1743 = vmatpush1.bf16.msra.mxu0 0
    %1744 = vmatprep.subr.bf16.mxu0 0
    %1745 = vmatpush1.bf16.msra.mxu0 0
    %1746 = vmatprep.subr.bf16.mxu0 0
    %1747 = vmatpush1.bf16.msra.mxu0 0
    %1748 = vmatprep.subr.bf16.mxu0 0
    %1749 = vmatpush1.bf16.msra.mxu0 0
    %1750 = vmatprep.subr.bf16.mxu0 0
    %1751 = vmatpush1.bf16.msra.mxu0 0
    %1752 = vmatprep.subr.bf16.mxu0 0
    %1753 = vmatpush1.bf16.msra.mxu0 0
    %1754 = vmatprep.subr.bf16.mxu0 0
    %1755 = vmatpush1.bf16.msra.mxu0 0
    %1756 = vmatprep.subr.bf16.mxu0 0
    %1757 = vmatpush1.bf16.msra.mxu0 0
    %1758 = vmatprep.mubr.bf16.mxu0 0
    %1759 = vmatmul.mubr.bf16.gmra.mrb[0].mxu0 %v1724
    %v1760 = vpop.f32.mrb[0].mxu0
    %v1761 = vadd.f32 0.0, %v1760
    %v1762 = vpop.f32.mrb[0].mxu0
    %v1763 = vpop.f32.mrb[0].mxu0
    %v1764 = vpop.f32.mrb[0].mxu0
    %1765 = vdwg.mxu0
    %v1766 = vadd.f32 %v1711, %v1761
    %v1767 = vld [vmem:[%s1 + $0x108] sm:$0x3]
    %1768 = vrot.lane.b32.xlu0 %v1618, 104
    %v1769 = vpop.permute.xlu0 %1768
    %1770 = vrot.lane.b32.xlu0 %v1619, 104
    %v1771 = vpop.permute.xlu0 %1770
    %v1775 = vsel %vm547, %v1767, 0
    %1777 = vmatprep.subr.bf16.mxu0 0
    %1778 = vmatpush1.bf16.msra.mxu0 %v1769
    %1779 = vmatprep.subr.bf16.mxu0 0
    %1780 = vmatpush1.bf16.msra.mxu0 %v1771
    %1781 = vmatprep.subr.bf16.mxu0 0
    %1782 = vmatpush1.bf16.msra.mxu0 0
    %1783 = vmatprep.subr.bf16.mxu0 0
    %1784 = vmatpush1.bf16.msra.mxu0 0
    %1785 = vmatprep.subr.bf16.mxu0 0
    %1786 = vmatpush1.bf16.msra.mxu0 0
    %1787 = vmatprep.subr.bf16.mxu0 0
    %1788 = vmatpush1.bf16.msra.mxu0 0
    %1789 = vmatprep.subr.bf16.mxu0 0
    %1790 = vmatpush1.bf16.msra.mxu0 0
    %1791 = vmatprep.subr.bf16.mxu0 0
    %1792 = vmatpush1.bf16.msra.mxu0 0
    %1793 = vmatprep.subr.bf16.mxu0 0
    %1794 = vmatpush1.bf16.msra.mxu0 0
    %1795 = vmatprep.subr.bf16.mxu0 0
    %1796 = vmatpush1.bf16.msra.mxu0 0
    %1797 = vmatprep.subr.bf16.mxu0 0
    %1798 = vmatpush1.bf16.msra.mxu0 0
    %1799 = vmatprep.subr.bf16.mxu0 0
    %1800 = vmatpush1.bf16.msra.mxu0 0
    %1801 = vmatprep.subr.bf16.mxu0 0
    %1802 = vmatpush1.bf16.msra.mxu0 0
    %1803 = vmatprep.subr.bf16.mxu0 0
    %1804 = vmatpush1.bf16.msra.mxu0 0
    %1805 = vmatprep.subr.bf16.mxu0 0
    %1806 = vmatpush1.bf16.msra.mxu0 0
    %1807 = vmatprep.subr.bf16.mxu0 0
    %1808 = vmatpush1.bf16.msra.mxu0 0
    %1809 = vmatprep.mubr.bf16.mxu0 0
    %1810 = vmatmul.mubr.bf16.gmra.mrb[0].mxu0 %v1775
    %v1811 = vpop.f32.mrb[0].mxu0
    %v1812 = vadd.f32 0.0, %v1811
    %v1813 = vpop.f32.mrb[0].mxu0
    %v1814 = vpop.f32.mrb[0].mxu0
    %v1815 = vpop.f32.mrb[0].mxu0
    %1816 = vdwg.mxu0
    %v1817 = vadd.f32 %v1766, %v1812
    %v1818 = vld [vmem:[%s1 + $0x110] sm:$0x3]
    %1819 = vrot.lane.b32.xlu0 %v1618, 96
    %v1820 = vpop.permute.xlu0 %1819
    %1821 = vrot.lane.b32.xlu0 %v1619, 96
    %v1822 = vpop.permute.xlu0 %1821
    %v1826 = vsel %vm547, %v1818, 0
    %1828 = vmatprep.subr.bf16.mxu0 0
    %1829 = vmatpush1.bf16.msra.mxu0 %v1820
    %1830 = vmatprep.subr.bf16.mxu0 0
    %1831 = vmatpush1.bf16.msra.mxu0 %v1822
    %1832 = vmatprep.subr.bf16.mxu0 0
    %1833 = vmatpush1.bf16.msra.mxu0 0
    %1834 = vmatprep.subr.bf16.mxu0 0
    %1835 = vmatpush1.bf16.msra.mxu0 0
    %1836 = vmatprep.subr.bf16.mxu0 0
    %1837 = vmatpush1.bf16.msra.mxu0 0
    %1838 = vmatprep.subr.bf16.mxu0 0
    %1839 = vmatpush1.bf16.msra.mxu0 0
    %1840 = vmatprep.subr.bf16.mxu0 0
    %1841 = vmatpush1.bf16.msra.mxu0 0
    %1842 = vmatprep.subr.bf16.mxu0 0
    %1843 = vmatpush1.bf16.msra.mxu0 0
    %1844 = vmatprep.subr.bf16.mxu0 0
    %1845 = vmatpush1.bf16.msra.mxu0 0
    %1846 = vmatprep.subr.bf16.mxu0 0
    %1847 = vmatpush1.bf16.msra.mxu0 0
    %1848 = vmatprep.subr.bf16.mxu0 0
    %1849 = vmatpush1.bf16.msra.mxu0 0
    %1850 = vmatprep.subr.bf16.mxu0 0
    %1851 = vmatpush1.bf16.msra.mxu0 0
    %1852 = vmatprep.subr.bf16.mxu0 0
    %1853 = vmatpush1.bf16.msra.mxu0 0
    %1854 = vmatprep.subr.bf16.mxu0 0
    %1855 = vmatpush1.bf16.msra.mxu0 0
    %1856 = vmatprep.subr.bf16.mxu0 0
    %1857 = vmatpush1.bf16.msra.mxu0 0
    %1858 = vmatprep.subr.bf16.mxu0 0
    %1859 = vmatpush1.bf16.msra.mxu0 0
    %1860 = vmatprep.mubr.bf16.mxu0 0
    %1861 = vmatmul.mubr.bf16.gmra.mrb[0].mxu0 %v1826
    %v1862 = vpop.f32.mrb[0].mxu0
    %v1863 = vadd.f32 0.0, %v1862
    %v1864 = vpop.f32.mrb[0].mxu0
    %v1865 = vpop.f32.mrb[0].mxu0
    %v1866 = vpop.f32.mrb[0].mxu0
    %1867 = vdwg.mxu0
    %v1868 = vadd.f32 %v1817, %v1863
    %v1869 = vld [vmem:[%s1 + $0x118] sm:$0x3]
    %1870 = vrot.lane.b32.xlu0 %v1618, 88
    %v1871 = vpop.permute.xlu0 %1870
    %1872 = vrot.lane.b32.xlu0 %v1619, 88
    %v1873 = vpop.permute.xlu0 %1872
    %v1877 = vsel %vm547, %v1869, 0
    %1879 = vmatprep.subr.bf16.mxu0 0
    %1880 = vmatpush1.bf16.msra.mxu0 %v1871
    %1881 = vmatprep.subr.bf16.mxu0 0
    %1882 = vmatpush1.bf16.msra.mxu0 %v1873
    %1883 = vmatprep.subr.bf16.mxu0 0
    %1884 = vmatpush1.bf16.msra.mxu0 0
    %1885 = vmatprep.subr.bf16.mxu0 0
    %1886 = vmatpush1.bf16.msra.mxu0 0
    %1887 = vmatprep.subr.bf16.mxu0 0
    %1888 = vmatpush1.bf16.msra.mxu0 0
    %1889 = vmatprep.subr.bf16.mxu0 0
    %1890 = vmatpush1.bf16.msra.mxu0 0
    %1891 = vmatprep.subr.bf16.mxu0 0
    %1892 = vmatpush1.bf16.msra.mxu0 0
    %1893 = vmatprep.subr.bf16.mxu0 0
    %1894 = vmatpush1.bf16.msra.mxu0 0
    %1895 = vmatprep.subr.bf16.mxu0 0
    %1896 = vmatpush1.bf16.msra.mxu0 0
    %1897 = vmatprep.subr.bf16.mxu0 0
    %1898 = vmatpush1.bf16.msra.mxu0 0
    %1899 = vmatprep.subr.bf16.mxu0 0
    %1900 = vmatpush1.bf16.msra.mxu0 0
    %1901 = vmatprep.subr.bf16.mxu0 0
    %1902 = vmatpush1.bf16.msra.mxu0 0
    %1903 = vmatprep.subr.bf16.mxu0 0
    %1904 = vmatpush1.bf16.msra.mxu0 0
    %1905 = vmatprep.subr.bf16.mxu0 0
    %1906 = vmatpush1.bf16.msra.mxu0 0
    %1907 = vmatprep.subr.bf16.mxu0 0
    %1908 = vmatpush1.bf16.msra.mxu0 0
    %1909 = vmatprep.subr.bf16.mxu0 0
    %1910 = vmatpush1.bf16.msra.mxu0 0
    %1911 = vmatprep.mubr.bf16.mxu0 0
    %1912 = vmatmul.mubr.bf16.gmra.mrb[0].mxu0 %v1877
    %v1913 = vpop.f32.mrb[0].mxu0
    %v1914 = vadd.f32 0.0, %v1913
    %v1915 = vpop.f32.mrb[0].mxu0
    %v1916 = vpop.f32.mrb[0].mxu0
    %v1917 = vpop.f32.mrb[0].mxu0
    %1918 = vdwg.mxu0
    %v1919 = vadd.f32 %v1868, %v1914
    %v1920 = vld [vmem:[%s1 + $0x120] sm:$0x3]
    %1921 = vrot.lane.b32.xlu0 %v1618, 80
    %v1922 = vpop.permute.xlu0 %1921
    %1923 = vrot.lane.b32.xlu0 %v1619, 80
    %v1924 = vpop.permute.xlu0 %1923
    %v1928 = vsel %vm547, %v1920, 0
    %1930 = vmatprep.subr.bf16.mxu0 0
    %1931 = vmatpush1.bf16.msra.mxu0 %v1922
    %1932 = vmatprep.subr.bf16.mxu0 0
    %1933 = vmatpush1.bf16.msra.mxu0 %v1924
    %1934 = vmatprep.subr.bf16.mxu0 0
    %1935 = vmatpush1.bf16.msra.mxu0 0
    %1936 = vmatprep.subr.bf16.mxu0 0
    %1937 = vmatpush1.bf16.msra.mxu0 0
    %1938 = vmatprep.subr.bf16.mxu0 0
    %1939 = vmatpush1.bf16.msra.mxu0 0
    %1940 = vmatprep.subr.bf16.mxu0 0
    %1941 = vmatpush1.bf16.msra.mxu0 0
    %1942 = vmatprep.subr.bf16.mxu0 0
    %1943 = vmatpush1.bf16.msra.mxu0 0
    %1944 = vmatprep.subr.bf16.mxu0 0
    %1945 = vmatpush1.bf16.msra.mxu0 0
    %1946 = vmatprep.subr.bf16.mxu0 0
    %1947 = vmatpush1.bf16.msra.mxu0 0
    %1948 = vmatprep.subr.bf16.mxu0 0
    %1949 = vmatpush1.bf16.msra.mxu0 0
    %1950 = vmatprep.subr.bf16.mxu0 0
    %1951 = vmatpush1.bf16.msra.mxu0 0
    %1952 = vmatprep.subr.bf16.mxu0 0
    %1953 = vmatpush1.bf16.msra.mxu0 0
    %1954 = vmatprep.subr.bf16.mxu0 0
    %1955 = vmatpush1.bf16.msra.mxu0 0
    %1956 = vmatprep.subr.bf16.mxu0 0
    %1957 = vmatpush1.bf16.msra.mxu0 0
    %1958 = vmatprep.subr.bf16.mxu0 0
    %1959 = vmatpush1.bf16.msra.mxu0 0
    %1960 = vmatprep.subr.bf16.mxu0 0
    %1961 = vmatpush1.bf16.msra.mxu0 0
    %1962 = vmatprep.mubr.bf16.mxu0 0
    %1963 = vmatmul.mubr.bf16.gmra.mrb[0].mxu0 %v1928
    %v1964 = vpop.f32.mrb[0].mxu0
    %v1965 = vadd.f32 0.0, %v1964
    %v1966 = vpop.f32.mrb[0].mxu0
    %v1967 = vpop.f32.mrb[0].mxu0
    %v1968 = vpop.f32.mrb[0].mxu0
    %1969 = vdwg.mxu0
    %v1970 = vadd.f32 %v1919, %v1965
    %v1971 = vld [vmem:[%s1 + $0x128] sm:$0x3]
    %1972 = vrot.lane.b32.xlu0 %v1618, 72
    %v1973 = vpop.permute.xlu0 %1972
    %1974 = vrot.lane.b32.xlu0 %v1619, 72
    %v1975 = vpop.permute.xlu0 %1974
    %v1979 = vsel %vm547, %v1971, 0
    %1981 = vmatprep.subr.bf16.mxu0 0
    %1982 = vmatpush1.bf16.msra.mxu0 %v1973
    %1983 = vmatprep.subr.bf16.mxu0 0
    %1984 = vmatpush1.bf16.msra.mxu0 %v1975
    %1985 = vmatprep.subr.bf16.mxu0 0
    %1986 = vmatpush1.bf16.msra.mxu0 0
    %1987 = vmatprep.subr.bf16.mxu0 0
    %1988 = vmatpush1.bf16.msra.mxu0 0
    %1989 = vmatprep.subr.bf16.mxu0 0
    %1990 = vmatpush1.bf16.msra.mxu0 0
    %1991 = vmatprep.subr.bf16.mxu0 0
    %1992 = vmatpush1.bf16.msra.mxu0 0
    %1993 = vmatprep.subr.bf16.mxu0 0
    %1994 = vmatpush1.bf16.msra.mxu0 0
    %1995 = vmatprep.subr.bf16.mxu0 0
    %1996 = vmatpush1.bf16.msra.mxu0 0
    %1997 = vmatprep.subr.bf16.mxu0 0
    %1998 = vmatpush1.bf16.msra.mxu0 0
    %1999 = vmatprep.subr.bf16.mxu0 0
    %2000 = vmatpush1.bf16.msra.mxu0 0
    %2001 = vmatprep.subr.bf16.mxu0 0
    %2002 = vmatpush1.bf16.msra.mxu0 0
    %2003 = vmatprep.subr.bf16.mxu0 0
    %2004 = vmatpush1.bf16.msra.mxu0 0
    %2005 = vmatprep.subr.bf16.mxu0 0
    %2006 = vmatpush1.bf16.msra.mxu0 0
    %2007 = vmatprep.subr.bf16.mxu0 0
    %2008 = vmatpush1.bf16.msra.mxu0 0
    %2009 = vmatprep.subr.bf16.mxu0 0
    %2010 = vmatpush1.bf16.msra.mxu0 0
    %2011 = vmatprep.subr.bf16.mxu0 0
    %2012 = vmatpush1.bf16.msra.mxu0 0
    %2013 = vmatprep.mubr.bf16.mxu0 0
    %2014 = vmatmul.mubr.bf16.gmra.mrb[0].mxu0 %v1979
    %v2015 = vpop.f32.mrb[0].mxu0
    %v2016 = vadd.f32 0.0, %v2015
    %v2017 = vpop.f32.mrb[0].mxu0
    %v2018 = vpop.f32.mrb[0].mxu0
    %v2019 = vpop.f32.mrb[0].mxu0
    %2020 = vdwg.mxu0
    %v2021 = vadd.f32 %v1970, %v2016
    %v2022 = vld [vmem:[%s2] sm:$0xf]
    %2024 = vset.pattern.permute.xlu0 3
    %2025 = vperm.xlu0 %2024, %v2022
    %v2026 = vpop.permute.xlu0 %2025
    %v2028 = vadd.f32 %v2021, %v2026
    %vm2029 = vcmask 58368
    %v2030 = vsel %vm2029, %v2028, -inf
    %2031 = vmax.xlane.f32.xlu0 %v2030
    %v2032 = vpop.xlane.xlu0 %2031
    %v2033 = vsub.f32 %v2028, %v2032
    %v2034 = vmul.f32 %v2033, 1.442695
    %v2035 = vpow.pop %v2034
    %v2036 = vsel %vm2029, %v2035, 0.0
    %2037 = vadd.xlane.f32.xlu0 %v2036
    %v2038 = vpop.xlane.xlu0 %2037
    %v2039 = vrcp.pop %v2038
    %v2040 = vmul.f32 %v2035, %v2039
    %v2041 = vsel %vm1565, %v2040, %v2028
    %v2042 = vsel %vm50, %v2041, 0.0
    %2043 = vst [vmem:[#allocation2] sm:$0xf] %v2042
    // Predicated region
    $region14: #{tpu_custom_call.1} parent=1 // pred_check
      _
    $region15: #{tpu_custom_call.1} parent=1 // pred_check_branch
      %2045 = sbr.rel (0) target = $region17
    $region16: #{tpu_custom_call.1} parent=1 // pred_region
      %s2047 = ssub.s32 64, 64
      %2048 = vsyncadd [#allocation3], %s2047
      %s2050 = sshll.u32 [#allocation2], 4
      %s2051 = int_to_ptr.vmem [resolvable:$true] %s2050
      %2053 = dma.vmem_to_hbm [thread:$0]  %s2051, 64, %s3, [#allocation3]
    $region17: #{tpu_custom_call.1} parent=1 // pred_fallthru
      _
    // Predicated region
    $region18: #{tpu_custom_call.1} parent=1 // pred_check
      _
    $region19: #{tpu_custom_call.1} parent=1 // pred_check_branch
      %2055 = sbr.rel (0) target = $region21
    $region20: #{tpu_custom_call.1} parent=1 // pred_region
      %2056 = dma.done [#allocation3], 64
    $region21: #{tpu_custom_call.1} parent=1 // pred_fallthru
      _
    %2057 = vsyncpa [#allocation3], 1

</llo_original>
